<compile_context>
chip_gen: v7x
topology: tpu7x:2x2x1
jax: 0.10.0
libtpu: 0.0.40
codegen_flags: <defaults>
</compile_context>

<pallas_src>
import jax
import jax.numpy as jnp
from jax import lax
from jax.experimental import pallas as pl
from jax.experimental.pallas import tpu as pltpu

NUM_CODEBOOK_ENTRIES = 512
LATENT_DIM = 128


def _vq_kernel(z_ref, e_hi_ref, e_lo_ref, e_sq_half_ref, q_ref):
    # z_ref:         (tm, C)  f32 token tile (cast to bf16 in-register)
    # e_hi_ref:      (N, C)   bf16 codebook (hi part; also the distance operand)
    # e_lo_ref:      (N, C)   bf16 codebook residual (lo part)
    # e_sq_half_ref: (1, N)   f32  precomputed 0.5 * ||e_n||^2
    # q_ref:         (tm, C)  f32 output tile

    z_bf = z_ref[...].astype(jnp.bfloat16)

    # z . e^T without materializing a transpose: contract the last dims of both
    # operands on the MXU (codebook stays in its native (N, C) layout), bf16
    # inputs with f32 accumulation.
    dots = lax.dot_general(
        z_bf, e_hi_ref[...],
        dimension_numbers=(((1,), (1,)), ((), ())),
        preferred_element_type=jnp.float32)                       # (tm, N)

    # argmin_n (0.5*||e_n||^2 - z.e_n) == argmin_n ||z - e_n||^2.
    # First-match argmin => torch-style tie-break, and the one-hot below stays
    # single-hot even for exactly tied distances.
    dist = e_sq_half_ref[...] - dots                               # (tm, N)
    idx = jnp.argmin(dist, axis=1, keepdims=True)                  # (tm, 1)

    # Hi/lo bf16 gather of codebook rows: two bf16 matmuls with f32 accumulate.
    # The one-hot rows contain a single exact 1.0, so each matmul picks one
    # codebook row exactly; hi + lo reconstructs the f32 row to ~2^-16 relative.
    onehot = (lax.broadcasted_iota(jnp.int32, dist.shape, 1) == idx
              ).astype(jnp.bfloat16)                               # (tm, N)
    z_q = (jnp.dot(onehot, e_hi_ref[...], preferred_element_type=jnp.float32)
           + jnp.dot(onehot, e_lo_ref[...], preferred_element_type=jnp.float32))
    q_ref[...] = z_q.astype(q_ref.dtype)


def _round_up(x, m):
    return pl.cdiv(x, m) * m


def _choose_tile(num_tokens, tm_max):
    """Token tile size.

    * Large T: use tm_max (default 1024) -> grid >= 2 automatically.
    * 256 <= T < 2*tm_max: split into two tiles so both v7x TensorCores run.
    * Tiny T: a single tile covering all tokens, rounded to the 8-row sublane
      grain (one grid step; splitting sub-256-token inputs is not worth it).
    """
    if num_tokens >= 2 * tm_max:
        return tm_max
    if num_tokens >= 256:
        return min(tm_max, _round_up(pl.cdiv(num_tokens, 2), 128))
    return max(8, _round_up(num_tokens, 8))


def vector_quantize_tokens(z_flat, embedding, *, tm=1024):
    """Nearest-codebook lookup on token-major activations.

    z_flat: (T, C) f32 tokens; embedding: (N, C) f32 codebook.
    Returns (T, C) f32 whose rows are (numerically) rows of `embedding`.
    """
    T, C = z_flat.shape
    N, Ce = embedding.shape
    assert Ce == C

    tm_eff = _choose_tile(T, tm)
    grid = pl.cdiv(T, tm_eff)
    Tp = grid * tm_eff

    z_in = z_flat
    if Tp != T:
        # Padding only happens when the last tile is ragged (not at the test
        # shape).  Padded rows produce throwaway output rows that are sliced off.
        # TODO(synk): rely on Pallas ragged-last-block masking to drop this pad.
        z_in = jnp.pad(z_flat, ((0, Tp - T), (0, 0)))

    # Hoisted codebook terms (tiny, computed once per call):
    #   e_hi + e_lo ~= embedding (bf16 hi/lo split), 0.5*||e||^2 for distances.
    e_f32 = embedding.astype(jnp.float32)
    e_hi = e_f32.astype(jnp.bfloat16)
    e_lo = (e_f32 - e_hi.astype(jnp.float32)).astype(jnp.bfloat16)
    e_sq_half = 0.5 * jnp.sum(e_f32 * e_f32, axis=-1)[None, :]     # (1, N)

    out = pl.pallas_call(
        _vq_kernel,
        out_shape=jax.ShapeDtypeStruct((Tp, C), z_flat.dtype),
        grid=(grid,),
        in_specs=[
            pl.BlockSpec((tm_eff, C), lambda i: (i, 0)),   # f32 token tile
            # Grid-invariant operands: constant index maps keep them resident
            # across steps (no re-DMA).  Single-buffering them would only save
            # ~384 KiB of VMEM, so the default pipeline mode is kept.
            pl.BlockSpec((N, C), lambda i: (0, 0)),        # bf16 codebook (hi)
            pl.BlockSpec((N, C), lambda i: (0, 0)),        # bf16 codebook (lo)
            pl.BlockSpec((1, N), lambda i: (0, 0)),        # 0.5*||e||^2
        ],
        out_specs=pl.BlockSpec((tm_eff, C), lambda i: (i, 0)),
        compiler_params=pltpu.CompilerParams(
            dimension_semantics=("parallel",)),
    )(z_in, e_hi, e_lo, e_sq_half)

    return out[:T] if Tp != T else out


def vector_quantize(z_e, embedding, *, tm=1024):
    """VectorQuantizerEMA.forward: z_e (B, C, H, W) f32 -> z_q (B, C, H, W) f32."""
    B, C, H, W = z_e.shape
    # NCHW -> token-major (T, C), matching z_e.permute(0,2,3,1).reshape(-1, C).
    # TODO(synk): in a full model keep activations NHWC end-to-end to avoid
    # these two wrapper transposes (pure layout plumbing, HBM round-trips).
    z_flat = jnp.transpose(z_e, (0, 2, 3, 1)).reshape(-1, C)
    q_flat = vector_quantize_tokens(z_flat, embedding, tm=tm)
    return q_flat.reshape(B, H, W, C).transpose(0, 3, 1, 2)


if __name__ == "__main__":
    key = jax.random.PRNGKey(0)
    k_emb, k_in = jax.random.split(key)

    # Module parameters (torch.randn(num_embeddings, embedding_dim)).
    embedding = jax.random.normal(
        k_emb, (NUM_CODEBOOK_ENTRIES, LATENT_DIM), jnp.float32)
    # TODO(synk): ema_cluster_size / ema_w buffers and `decay` are training-only
    # state and are unused by forward(); not implemented here.

    # Small input consistent with the module: B=2, C=LATENT_DIM, H=W=8 -> 128 tokens.
    z_e = jax.random.normal(k_in, (2, LATENT_DIM, 8, 8), jnp.float32)

    z_q = vector_quantize(z_e, embedding)
    jax.block_until_ready(z_q)
    assert z_q.shape == z_e.shape

    # ---- correctness checks (robust to bf16 rounding of near-tied distances) ----
    B, C, H, W = z_e.shape
    z_flat = jnp.transpose(z_e, (0, 2, 3, 1)).reshape(-1, C)
    q_flat = jnp.transpose(z_q, (0, 2, 3, 1)).reshape(-1, C)

    # (1) every output row is (numerically) a row of the codebook
    row_err = jnp.min(
        jnp.sum((q_flat[:, None, :] - embedding[None, :, :]) ** 2, axis=-1), axis=1)
    assert bool(jnp.all(row_err < 1e-6)), "output rows are not codebook entries"

    # (2) each selected row is the (near-)nearest codebook entry under exact f32
    #     distance; bf16 distances may only swap genuine near-ties, whose excess
    #     distance is far below this tolerance.
    d_exact = jnp.sum((z_flat[:, None, :] - embedding[None, :, :]) ** 2, axis=-1)
    d_best = jnp.min(d_exact, axis=1)
    d_kern = jnp.sum((z_flat - q_flat) ** 2, axis=-1)
    assert bool(jnp.all(d_kern <= d_best + 1e-2 * (jnp.abs(d_best) + 1.0))), \
        "selected entries are not nearest codebook neighbours"

    print("KERNEL_OK")
</pallas_src>

<mosaic_0001>
module attributes {stable_mosaic.version = 11 : i64} {
  func.func @_vq_kernel(%arg0: i32, %arg1: memref<128x128xf32, #tpu.memory_space<vmem>>, %arg2: memref<512x128xbf16, #tpu.memory_space<vmem>>, %arg3: memref<512x128xbf16, #tpu.memory_space<vmem>>, %arg4: memref<1x512xf32, #tpu.memory_space<vmem>>, %arg5: memref<128x128xf32, #tpu.memory_space<vmem>>) attributes {dimension_semantics = [#tpu.dimension_semantics<parallel>], iteration_bounds = array<i64: 1>, scalar_prefetch = 0 : i64, scratch_operands = 0 : i64, tpu.core_type = #tpu.core_type<tc>, window_params = [{transform_indices = @transform_0, window_bounds = array<i64: 128, 128>}, {pipeline_mode = #tpu.pipeline_mode<synchronous>, transform_indices = @transform_1, window_bounds = array<i64: 512, 128>}, {pipeline_mode = #tpu.pipeline_mode<synchronous>, transform_indices = @transform_2, window_bounds = array<i64: 512, 128>}, {pipeline_mode = #tpu.pipeline_mode<synchronous>, transform_indices = @transform_3, window_bounds = array<i64: 1, 512>}, {transform_indices = @transform_4, window_bounds = array<i64: 128, 128>}]} {
    %c0 = arith.constant 0 : index
    %c0_0 = arith.constant 0 : index
    %0 = vector.load %arg1[%c0, %c0_0] : memref<128x128xf32, #tpu.memory_space<vmem>>, vector<128x128xf32>
    %1 = arith.truncf %0 : vector<128x128xf32> to vector<128x128xbf16>
    %c0_1 = arith.constant 0 : index
    %c0_2 = arith.constant 0 : index
    %2 = vector.load %arg2[%c0_1, %c0_2] : memref<512x128xbf16, #tpu.memory_space<vmem>>, vector<512x128xbf16>
    %cst = arith.constant dense<0.000000e+00> : vector<128x512xf32>
    %3 = tpu.matmul %1, %2, %cst {dimension_numbers = #tpu.dot_dimension_numbers<[1], [1], [0], [0], [0, 0, 1, 0], [], []>} : vector<128x128xbf16>, vector<512x128xbf16>, vector<128x512xf32> -> vector<128x512xf32>
    %c0_3 = arith.constant 0 : index
    %c0_4 = arith.constant 0 : index
    %4 = vector.load %arg4[%c0_3, %c0_4] : memref<1x512xf32, #tpu.memory_space<vmem>>, vector<1x512xf32>
    %5 = vector.broadcast %4 : vector<1x512xf32> to vector<128x512xf32>
    %6 = arith.subf %5, %3 : vector<128x512xf32>
    %7 = tpu.reduce_index %6 {axis = 1 : i32, kind = #tpu.reduction_kind<arg_min>} : vector<128x512xf32> -> vector<128xi32>
    %8 = vector.shape_cast %7 : vector<128xi32> to vector<128x1xi32>
    %9 = tpu.iota {dimensions = array<i32: 1>} : vector<128x512xi32>
    %10 = vector.broadcast %8 : vector<128x1xi32> to vector<128x512xi32>
    %11 = arith.cmpi eq, %9, %10 : vector<128x512xi32>
    %12 = arith.extui %11 : vector<128x512xi1> to vector<128x512xi32>
    %13 = arith.sitofp %12 : vector<128x512xi32> to vector<128x512xf32>
    %14 = arith.truncf %13 : vector<128x512xf32> to vector<128x512xbf16>
    %c0_5 = arith.constant 0 : index
    %c0_6 = arith.constant 0 : index
    %15 = vector.load %arg2[%c0_5, %c0_6] : memref<512x128xbf16, #tpu.memory_space<vmem>>, vector<512x128xbf16>
    %cst_7 = arith.constant dense<0.000000e+00> : vector<128x128xf32>
    %16 = tpu.matmul %14, %15, %cst_7 {dimension_numbers = #tpu.dot_dimension_numbers<[1], [0], [0], [1], [0, 0, 1, 1], [], []>} : vector<128x512xbf16>, vector<512x128xbf16>, vector<128x128xf32> -> vector<128x128xf32>
    %c0_8 = arith.constant 0 : index
    %c0_9 = arith.constant 0 : index
    %17 = vector.load %arg3[%c0_8, %c0_9] : memref<512x128xbf16, #tpu.memory_space<vmem>>, vector<512x128xbf16>
    %cst_10 = arith.constant dense<0.000000e+00> : vector<128x128xf32>
    %18 = tpu.matmul %14, %17, %cst_10 {dimension_numbers = #tpu.dot_dimension_numbers<[1], [0], [0], [1], [0, 0, 1, 1], [], []>} : vector<128x512xbf16>, vector<512x128xbf16>, vector<128x128xf32> -> vector<128x128xf32>
    %19 = arith.addf %16, %18 : vector<128x128xf32>
    %c0_11 = arith.constant 0 : index
    %c0_12 = arith.constant 0 : index
    %20 = vector.load %arg5[%c0_11, %c0_12] : memref<128x128xf32, #tpu.memory_space<vmem>>, vector<128x128xf32>
    tpu.vector_store %arg5[%c0_11, %c0_12], %19 {strides = array<i32>} : memref<128x128xf32, #tpu.memory_space<vmem>>, vector<128x128xf32>,
    return
  }
  func.func @transform_0(%arg0: i32) -> (i32, i32) {
    %c0_i32 = arith.constant 0 : i32
    %c0_i32_0 = arith.constant 0 : i32
    return %arg0, %c0_i32 : i32, i32
  }
  func.func @transform_1(%arg0: i32) -> (i32, i32) {
    %c0_i32 = arith.constant 0 : i32
    %c0_i32_0 = arith.constant 0 : i32
    %c0_i32_1 = arith.constant 0 : i32
    return %c0_i32, %c0_i32_0 : i32, i32
  }
  func.func @transform_2(%arg0: i32) -> (i32, i32) {
    %c0_i32 = arith.constant 0 : i32
    %c0_i32_0 = arith.constant 0 : i32
    %c0_i32_1 = arith.constant 0 : i32
    return %c0_i32, %c0_i32_0 : i32, i32
  }
  func.func @transform_3(%arg0: i32) -> (i32, i32) {
    %c0_i32 = arith.constant 0 : i32
    %c0_i32_0 = arith.constant 0 : i32
    %c0_i32_1 = arith.constant 0 : i32
    return %c0_i32, %c0_i32_0 : i32, i32
  }
  func.func @transform_4(%arg0: i32) -> (i32, i32) {
    %c0_i32 = arith.constant 0 : i32
    %c0_i32_0 = arith.constant 0 : i32
    return %arg0, %c0_i32 : i32, i32
  }
}

</mosaic_0001>

<llo_original>
// kernel: tpu_custom_call.1
$region0: #{tpu_custom_call.1}
  #allocation0 [shape = 'u32[]', space=smem, size = 0x4, offset = 0x4, fixed_abs, tag = 'smem constant byte address 0x4 - core index']
  #allocation1 [shape = 'u32[144,128]{1,0:T(1,128)}', space=vmem, size = 0x12000, scoped, tag = 'internal scratch']
  %s0 = inlined_call_operand.hbm [shape: f32[128,128], index: 0, kind: input, shape index: {}]
  %s1 = inlined_call_operand.hbm [shape: bf16[512,128], index: 1, kind: input, shape index: {}]
  %s2 = inlined_call_operand.hbm [shape: bf16[512,128], index: 2, kind: input, shape index: {}]
  %s3 = inlined_call_operand.vmem [shape: f32[1,512], index: 3, kind: input, shape index: {}]
  %s4 = inlined_call_operand.hbm [shape: f32[128,128], index: 4, kind: output, shape index: {}]
  %s5 = sld [smem:[#allocation0]]
  $region38: #{tpu_custom_call.1} parent=0
    _
  %s7 = ssub.s32 1, %s5
  %s8 = scalar_select 0, %s7, %s5
  $region1: #{tpu_custom_call.1} parent=0
    #allocation2 [shape = 'u8[65536]{0}', space=vmem, size = 0x10000, scoped, tag = 'input window, operand 0, single buffered']
    #allocation3 [shape = 's32[1]{0}', space=sflag, size = 0x4, scoped, tag = 'scoped memory for tpu_custom_call.1']
    #allocation4 [shape = 's32[1]{0}', space=sflag, size = 0x4, scoped, tag = 'scoped memory for tpu_custom_call.1']
    #allocation5 [shape = 'u8[131072]{0}', space=vmem, size = 0x20000, scoped, tag = 'input window, operand 1, single buffered']
    #allocation6 [shape = 's32[1]{0}', space=sflag, size = 0x4, scoped, tag = 'scoped memory for tpu_custom_call.1']
    #allocation7 [shape = 'u8[131072]{0}', space=vmem, size = 0x20000, scoped, tag = 'input window, operand 2, single buffered']
    #allocation8 [shape = 'u8[65536]{0}', space=vmem, size = 0x10000, scoped, tag = 'output window, operand 0, single buffered']
    %9 = vsyncpa [#allocation3], 0
    %10 = vsyncpa [#allocation6], 0
    %11 = vsyncpa [#allocation4], 0
    // Predicated region
    $region2: #{tpu_custom_call.1} parent=1 // pred_check
      _
    $region3: #{tpu_custom_call.1} parent=1 // pred_check_branch
      %13 = sbr.rel (0) target = $region5
    $region4: #{tpu_custom_call.1} parent=1 // pred_region
      %s15 = ssub.s32 2048, 2048
      %16 = vsyncadd [#allocation3], %s15
      %s17 = sshll.u32 [#allocation2], 4
      %s18 = int_to_ptr.vmem [resolvable:$true] %s17
      %23 = dma.hbm_to_vmem [thread:$0]  %s0, 2048, %s18, [#allocation3], 128, 128, 8
    $region5: #{tpu_custom_call.1} parent=1 // pred_fallthru
      _
    // Predicated region
    $region6: #{tpu_custom_call.1} parent=1 // pred_check
      _
    $region7: #{tpu_custom_call.1} parent=1 // pred_check_branch
      %25 = sbr.rel (0) target = $region9
    $region8: #{tpu_custom_call.1} parent=1 // pred_region
      %s27 = ssub.s32 4096, 4096
      %28 = vsyncadd [#allocation6], %s27
      %s29 = sshll.u32 [#allocation5], 4
      %s30 = int_to_ptr.vmem [resolvable:$true] %s29
      %35 = dma.hbm_to_vmem [thread:$0]  %s1, 4096, %s30, [#allocation6], 64, 64, 4
    $region9: #{tpu_custom_call.1} parent=1 // pred_fallthru
      _
    // Predicated region
    $region10: #{tpu_custom_call.1} parent=1 // pred_check
      _
    $region11: #{tpu_custom_call.1} parent=1 // pred_check_branch
      %37 = sbr.rel (0) target = $region13
    $region12: #{tpu_custom_call.1} parent=1 // pred_region
      %s39 = ssub.s32 4096, 4096
      %40 = vsyncadd [#allocation6], %s39
      %s41 = sshll.u32 [#allocation7], 4
      %s42 = int_to_ptr.vmem [resolvable:$true] %s41
      %47 = dma.hbm_to_vmem [thread:$0]  %s2, 4096, %s42, [#allocation6], 64, 64, 4
    $region13: #{tpu_custom_call.1} parent=1 // pred_fallthru
      _
    // Predicated region
    $region14: #{tpu_custom_call.1} parent=1 // pred_check
      _
    $region15: #{tpu_custom_call.1} parent=1 // pred_check_branch
      %49 = sbr.rel (0) target = $region17
    $region16: #{tpu_custom_call.1} parent=1 // pred_region
      _
    $region17: #{tpu_custom_call.1} parent=1 // pred_fallthru
      _
    // Predicated region
    $region18: #{tpu_custom_call.1} parent=1 // pred_check
      _
    $region19: #{tpu_custom_call.1} parent=1 // pred_check_branch
      %51 = sbr.rel (0) target = $region21
    $region20: #{tpu_custom_call.1} parent=1 // pred_region
      %52 = dma.done [#allocation3], 2048
    $region21: #{tpu_custom_call.1} parent=1 // pred_fallthru
      _
    // Predicated region
    $region22: #{tpu_custom_call.1} parent=1 // pred_check
      _
    $region23: #{tpu_custom_call.1} parent=1 // pred_check_branch
      %54 = sbr.rel (0) target = $region25
    $region24: #{tpu_custom_call.1} parent=1 // pred_region
      %55 = dma.done [#allocation6], 4096
    $region25: #{tpu_custom_call.1} parent=1 // pred_fallthru
      _
    // Predicated region
    $region26: #{tpu_custom_call.1} parent=1 // pred_check
      _
    $region27: #{tpu_custom_call.1} parent=1 // pred_check_branch
      %57 = sbr.rel (0) target = $region29
    $region28: #{tpu_custom_call.1} parent=1 // pred_region
      %58 = dma.done [#allocation6], 4096
    $region29: #{tpu_custom_call.1} parent=1 // pred_fallthru
      _
    %v60 = vld [vmem:[#allocation2] sm:$0xff]
    %v61 = vld [vmem:[#allocation2 + $0x8] sm:$0xff]
    %v62 = vld [vmem:[#allocation2 + $0x10] sm:$0xff]
    %v63 = vld [vmem:[#allocation2 + $0x18] sm:$0xff]
    %v64 = vld [vmem:[#allocation2 + $0x20] sm:$0xff]
    %v65 = vld [vmem:[#allocation2 + $0x28] sm:$0xff]
    %v66 = vld [vmem:[#allocation2 + $0x30] sm:$0xff]
    %v67 = vld [vmem:[#allocation2 + $0x38] sm:$0xff]
    %v68 = vld [vmem:[#allocation2 + $0x40] sm:$0xff]
    %v69 = vld [vmem:[#allocation2 + $0x48] sm:$0xff]
    %v70 = vld [vmem:[#allocation2 + $0x50] sm:$0xff]
    %v71 = vld [vmem:[#allocation2 + $0x58] sm:$0xff]
    %v72 = vld [vmem:[#allocation2 + $0x60] sm:$0xff]
    %v73 = vld [vmem:[#allocation2 + $0x68] sm:$0xff]
    %v74 = vld [vmem:[#allocation2 + $0x70] sm:$0xff]
    %v75 = vld [vmem:[#allocation2 + $0x78] sm:$0xff]
    %v76 = vpack.c.bf16 %v61, %v60
    %v77 = vpack.c.bf16 %v63, %v62
    %v78 = vpack.c.bf16 %v65, %v64
    %v79 = vpack.c.bf16 %v67, %v66
    %v80 = vpack.c.bf16 %v69, %v68
    %v81 = vpack.c.bf16 %v71, %v70
    %v82 = vpack.c.bf16 %v73, %v72
    %v83 = vpack.c.bf16 %v75, %v74
    %v84 = vld [vmem:[#allocation5] sm:$0xf]
    %v85 = vld [vmem:[#allocation5 + $0x4] sm:$0xf]
    %v86 = vld [vmem:[#allocation5 + $0x8] sm:$0xf]
    %v87 = vld [vmem:[#allocation5 + $0xc] sm:$0xf]
    %v88 = vld [vmem:[#allocation5 + $0x10] sm:$0xf]
    %v89 = vld [vmem:[#allocation5 + $0x14] sm:$0xf]
    %v90 = vld [vmem:[#allocation5 + $0x18] sm:$0xf]
    %v91 = vld [vmem:[#allocation5 + $0x1c] sm:$0xf]
    %v92 = vld [vmem:[#allocation5 + $0x20] sm:$0xf]
    %v93 = vld [vmem:[#allocation5 + $0x24] sm:$0xf]
    %v94 = vld [vmem:[#allocation5 + $0x28] sm:$0xf]
    %v95 = vld [vmem:[#allocation5 + $0x2c] sm:$0xf]
    %v96 = vld [vmem:[#allocation5 + $0x30] sm:$0xf]
    %v97 = vld [vmem:[#allocation5 + $0x34] sm:$0xf]
    %v98 = vld [vmem:[#allocation5 + $0x38] sm:$0xf]
    %v99 = vld [vmem:[#allocation5 + $0x3c] sm:$0xf]
    %v100 = vld [vmem:[#allocation5 + $0x40] sm:$0xf]
    %v101 = vld [vmem:[#allocation5 + $0x44] sm:$0xf]
    %v102 = vld [vmem:[#allocation5 + $0x48] sm:$0xf]
    %v103 = vld [vmem:[#allocation5 + $0x4c] sm:$0xf]
    %v104 = vld [vmem:[#allocation5 + $0x50] sm:$0xf]
    %v105 = vld [vmem:[#allocation5 + $0x54] sm:$0xf]
    %v106 = vld [vmem:[#allocation5 + $0x58] sm:$0xf]
    %v107 = vld [vmem:[#allocation5 + $0x5c] sm:$0xf]
    %v108 = vld [vmem:[#allocation5 + $0x60] sm:$0xf]
    %v109 = vld [vmem:[#allocation5 + $0x64] sm:$0xf]
    %v110 = vld [vmem:[#allocation5 + $0x68] sm:$0xf]
    %v111 = vld [vmem:[#allocation5 + $0x6c] sm:$0xf]
    %v112 = vld [vmem:[#allocation5 + $0x70] sm:$0xf]
    %v113 = vld [vmem:[#allocation5 + $0x74] sm:$0xf]
    %v114 = vld [vmem:[#allocation5 + $0x78] sm:$0xf]
    %v115 = vld [vmem:[#allocation5 + $0x7c] sm:$0xf]
    %v116 = vld [vmem:[#allocation5 + $0x80] sm:$0xf]
    %v117 = vld [vmem:[#allocation5 + $0x84] sm:$0xf]
    %v118 = vld [vmem:[#allocation5 + $0x88] sm:$0xf]
    %v119 = vld [vmem:[#allocation5 + $0x8c] sm:$0xf]
    %v120 = vld [vmem:[#allocation5 + $0x90] sm:$0xf]
    %v121 = vld [vmem:[#allocation5 + $0x94] sm:$0xf]
    %v122 = vld [vmem:[#allocation5 + $0x98] sm:$0xf]
    %v123 = vld [vmem:[#allocation5 + $0x9c] sm:$0xf]
    %v124 = vld [vmem:[#allocation5 + $0xa0] sm:$0xf]
    %v125 = vld [vmem:[#allocation5 + $0xa4] sm:$0xf]
    %v126 = vld [vmem:[#allocation5 + $0xa8] sm:$0xf]
    %v127 = vld [vmem:[#allocation5 + $0xac] sm:$0xf]
    %v128 = vld [vmem:[#allocation5 + $0xb0] sm:$0xf]
    %v129 = vld [vmem:[#allocation5 + $0xb4] sm:$0xf]
    %v130 = vld [vmem:[#allocation5 + $0xb8] sm:$0xf]
    %v131 = vld [vmem:[#allocation5 + $0xbc] sm:$0xf]
    %v132 = vld [vmem:[#allocation5 + $0xc0] sm:$0xf]
    %v133 = vld [vmem:[#allocation5 + $0xc4] sm:$0xf]
    %v134 = vld [vmem:[#allocation5 + $0xc8] sm:$0xf]
    %v135 = vld [vmem:[#allocation5 + $0xcc] sm:$0xf]
    %v136 = vld [vmem:[#allocation5 + $0xd0] sm:$0xf]
    %v137 = vld [vmem:[#allocation5 + $0xd4] sm:$0xf]
    %v138 = vld [vmem:[#allocation5 + $0xd8] sm:$0xf]
    %v139 = vld [vmem:[#allocation5 + $0xdc] sm:$0xf]
    %v140 = vld [vmem:[#allocation5 + $0xe0] sm:$0xf]
    %v141 = vld [vmem:[#allocation5 + $0xe4] sm:$0xf]
    %v142 = vld [vmem:[#allocation5 + $0xe8] sm:$0xf]
    %v143 = vld [vmem:[#allocation5 + $0xec] sm:$0xf]
    %v144 = vld [vmem:[#allocation5 + $0xf0] sm:$0xf]
    %v145 = vld [vmem:[#allocation5 + $0xf4] sm:$0xf]
    %v146 = vld [vmem:[#allocation5 + $0xf8] sm:$0xf]
    %v147 = vld [vmem:[#allocation5 + $0xfc] sm:$0xf]
    %v212 = vunpack.c.l.b16 %v84
    %v213 = vunpack.c.l.b16 %v85
    %v214 = vunpack.c.l.b16 %v86
    %v215 = vunpack.c.l.b16 %v87
    %v216 = vunpack.c.l.b16 %v88
    %v217 = vunpack.c.l.b16 %v89
    %v218 = vunpack.c.l.b16 %v90
    %v219 = vunpack.c.l.b16 %v91
    %v220 = vunpack.c.l.b16 %v92
    %v221 = vunpack.c.l.b16 %v93
    %v222 = vunpack.c.l.b16 %v94
    %v223 = vunpack.c.l.b16 %v95
    %v224 = vunpack.c.l.b16 %v96
    %v225 = vunpack.c.l.b16 %v97
    %v226 = vunpack.c.l.b16 %v98
    %v227 = vunpack.c.l.b16 %v99
    %v228 = vunpack.c.l.b16 %v100
    %v229 = vunpack.c.l.b16 %v101
    %v230 = vunpack.c.l.b16 %v102
    %v231 = vunpack.c.l.b16 %v103
    %v232 = vunpack.c.l.b16 %v104
    %v233 = vunpack.c.l.b16 %v105
    %v234 = vunpack.c.l.b16 %v106
    %v235 = vunpack.c.l.b16 %v107
    %v236 = vunpack.c.l.b16 %v108
    %v237 = vunpack.c.l.b16 %v109
    %v238 = vunpack.c.l.b16 %v110
    %v239 = vunpack.c.l.b16 %v111
    %v240 = vunpack.c.l.b16 %v112
    %v241 = vunpack.c.l.b16 %v113
    %v242 = vunpack.c.l.b16 %v114
    %v243 = vunpack.c.l.b16 %v115
    %v244 = vunpack.c.l.b16 %v116
    %v245 = vunpack.c.l.b16 %v117
    %v246 = vunpack.c.l.b16 %v118
    %v247 = vunpack.c.l.b16 %v119
    %v248 = vunpack.c.l.b16 %v120
    %v249 = vunpack.c.l.b16 %v121
    %v250 = vunpack.c.l.b16 %v122
    %v251 = vunpack.c.l.b16 %v123
    %v252 = vunpack.c.l.b16 %v124
    %v253 = vunpack.c.l.b16 %v125
    %v254 = vunpack.c.l.b16 %v126
    %v255 = vunpack.c.l.b16 %v127
    %v256 = vunpack.c.l.b16 %v128
    %v257 = vunpack.c.l.b16 %v129
    %v258 = vunpack.c.l.b16 %v130
    %v259 = vunpack.c.l.b16 %v131
    %v260 = vunpack.c.l.b16 %v132
    %v261 = vunpack.c.l.b16 %v133
    %v262 = vunpack.c.l.b16 %v134
    %v263 = vunpack.c.l.b16 %v135
    %v264 = vunpack.c.l.b16 %v136
    %v265 = vunpack.c.l.b16 %v137
    %v266 = vunpack.c.l.b16 %v138
    %v267 = vunpack.c.l.b16 %v139
    %v268 = vunpack.c.l.b16 %v140
    %v269 = vunpack.c.l.b16 %v141
    %v270 = vunpack.c.l.b16 %v142
    %v271 = vunpack.c.l.b16 %v143
    %v272 = vunpack.c.l.b16 %v144
    %v273 = vunpack.c.l.b16 %v145
    %v274 = vunpack.c.l.b16 %v146
    %v275 = vunpack.c.l.b16 %v147
    %v276 = vpack.c.b16 %v213, %v212
    %v277 = vpack.c.b16 %v215, %v214
    %v278 = vpack.c.b16 %v217, %v216
    %v279 = vpack.c.b16 %v219, %v218
    %v280 = vpack.c.b16 %v221, %v220
    %v281 = vpack.c.b16 %v223, %v222
    %v282 = vpack.c.b16 %v225, %v224
    %v283 = vpack.c.b16 %v227, %v226
    %v284 = vpack.c.b16 %v229, %v228
    %v285 = vpack.c.b16 %v231, %v230
    %v286 = vpack.c.b16 %v233, %v232
    %v287 = vpack.c.b16 %v235, %v234
    %v288 = vpack.c.b16 %v237, %v236
    %v289 = vpack.c.b16 %v239, %v238
    %v290 = vpack.c.b16 %v241, %v240
    %v291 = vpack.c.b16 %v243, %v242
    %v292 = vpack.c.b16 %v245, %v244
    %v293 = vpack.c.b16 %v247, %v246
    %v294 = vpack.c.b16 %v249, %v248
    %v295 = vpack.c.b16 %v251, %v250
    %v296 = vpack.c.b16 %v253, %v252
    %v297 = vpack.c.b16 %v255, %v254
    %v298 = vpack.c.b16 %v257, %v256
    %v299 = vpack.c.b16 %v259, %v258
    %v300 = vpack.c.b16 %v261, %v260
    %v301 = vpack.c.b16 %v263, %v262
    %v302 = vpack.c.b16 %v265, %v264
    %v303 = vpack.c.b16 %v267, %v266
    %v304 = vpack.c.b16 %v269, %v268
    %v305 = vpack.c.b16 %v271, %v270
    %v306 = vpack.c.b16 %v273, %v272
    %v307 = vpack.c.b16 %v275, %v274
    %340 = vmatprep.subr.bf16.mxu0 0
    %341 = vmatpush1.bf16.xpose.msra.mxu0 %v276
    %342 = vmatprep.subr.bf16.mxu0 0
    %343 = vmatpush1.bf16.xpose.msra.mxu0 %v277
    %344 = vmatprep.subr.bf16.mxu0 0
    %345 = vmatpush1.bf16.xpose.msra.mxu0 %v278
    %346 = vmatprep.subr.bf16.mxu0 0
    %347 = vmatpush1.bf16.xpose.msra.mxu0 %v279
    %348 = vmatprep.subr.bf16.mxu0 0
    %349 = vmatpush1.bf16.xpose.msra.mxu0 %v280
    %350 = vmatprep.subr.bf16.mxu0 0
    %351 = vmatpush1.bf16.xpose.msra.mxu0 %v281
    %352 = vmatprep.subr.bf16.mxu0 0
    %353 = vmatpush1.bf16.xpose.msra.mxu0 %v282
    %354 = vmatprep.subr.bf16.mxu0 0
    %355 = vmatpush1.bf16.xpose.msra.mxu0 %v283
    %356 = vmatprep.subr.bf16.mxu0 0
    %357 = vmatpush1.bf16.xpose.msra.mxu0 %v284
    %358 = vmatprep.subr.bf16.mxu0 0
    %359 = vmatpush1.bf16.xpose.msra.mxu0 %v285
    %360 = vmatprep.subr.bf16.mxu0 0
    %361 = vmatpush1.bf16.xpose.msra.mxu0 %v286
    %362 = vmatprep.subr.bf16.mxu0 0
    %363 = vmatpush1.bf16.xpose.msra.mxu0 %v287
    %364 = vmatprep.subr.bf16.mxu0 0
    %365 = vmatpush1.bf16.xpose.msra.mxu0 %v288
    %366 = vmatprep.subr.bf16.mxu0 0
    %367 = vmatpush1.bf16.xpose.msra.mxu0 %v289
    %368 = vmatprep.subr.bf16.mxu0 0
    %369 = vmatpush1.bf16.xpose.msra.mxu0 %v290
    %370 = vmatprep.subr.bf16.mxu0 0
    %371 = vmatpush1.bf16.xpose.msra.mxu0 %v291
    %372 = vmatprep.mubr.bf16.mxu0 0
    %373 = vmatmul.mubr.bf16.gmra.mrb[0].mxu0 %v76
    %v374 = vpop.f32.mrb[0].mxu0
    %v375 = vadd.f32 0.0, %v374
    %v376 = vpop.f32.mrb[0].mxu0
    %v377 = vadd.f32 0.0, %v376
    %v378 = vpop.f32.mrb[0].mxu0
    %v379 = vadd.f32 0.0, %v378
    %v380 = vpop.f32.mrb[0].mxu0
    %v381 = vadd.f32 0.0, %v380
    %382 = vmatprep.mubr.bf16.mxu0 0
    %383 = vmatmul.mubr.bf16.gmra.mrb[0].mxu0 %v77
    %v384 = vpop.f32.mrb[0].mxu0
    %v385 = vadd.f32 0.0, %v384
    %v386 = vpop.f32.mrb[0].mxu0
    %v387 = vadd.f32 0.0, %v386
    %v388 = vpop.f32.mrb[0].mxu0
    %v389 = vadd.f32 0.0, %v388
    %v390 = vpop.f32.mrb[0].mxu0
    %v391 = vadd.f32 0.0, %v390
    %392 = vmatprep.mubr.bf16.mxu0 0
    %393 = vmatmul.mubr.bf16.gmra.mrb[0].mxu0 %v78
    %v394 = vpop.f32.mrb[0].mxu0
    %v395 = vadd.f32 0.0, %v394
    %v396 = vpop.f32.mrb[0].mxu0
    %v397 = vadd.f32 0.0, %v396
    %v398 = vpop.f32.mrb[0].mxu0
    %v399 = vadd.f32 0.0, %v398
    %v400 = vpop.f32.mrb[0].mxu0
    %v401 = vadd.f32 0.0, %v400
    %402 = vmatprep.mubr.bf16.mxu0 0
    %403 = vmatmul.mubr.bf16.gmra.mrb[0].mxu0 %v79
    %v404 = vpop.f32.mrb[0].mxu0
    %v405 = vadd.f32 0.0, %v404
    %v406 = vpop.f32.mrb[0].mxu0
    %v407 = vadd.f32 0.0, %v406
    %v408 = vpop.f32.mrb[0].mxu0
    %v409 = vadd.f32 0.0, %v408
    %v410 = vpop.f32.mrb[0].mxu0
    %v411 = vadd.f32 0.0, %v410
    %412 = vmatprep.mubr.bf16.mxu0 0
    %413 = vmatmul.mubr.bf16.gmra.mrb[0].mxu0 %v80
    %v414 = vpop.f32.mrb[0].mxu0
    %v415 = vadd.f32 0.0, %v414
    %v416 = vpop.f32.mrb[0].mxu0
    %v417 = vadd.f32 0.0, %v416
    %v418 = vpop.f32.mrb[0].mxu0
    %v419 = vadd.f32 0.0, %v418
    %v420 = vpop.f32.mrb[0].mxu0
    %v421 = vadd.f32 0.0, %v420
    %422 = vmatprep.mubr.bf16.mxu0 0
    %423 = vmatmul.mubr.bf16.gmra.mrb[0].mxu0 %v81
    %v424 = vpop.f32.mrb[0].mxu0
    %v425 = vadd.f32 0.0, %v424
    %v426 = vpop.f32.mrb[0].mxu0
    %v427 = vadd.f32 0.0, %v426
    %v428 = vpop.f32.mrb[0].mxu0
    %v429 = vadd.f32 0.0, %v428
    %v430 = vpop.f32.mrb[0].mxu0
    %v431 = vadd.f32 0.0, %v430
    %432 = vmatprep.mubr.bf16.mxu0 0
    %433 = vmatmul.mubr.bf16.gmra.mrb[0].mxu0 %v82
    %v434 = vpop.f32.mrb[0].mxu0
    %v435 = vadd.f32 0.0, %v434
    %v436 = vpop.f32.mrb[0].mxu0
    %v437 = vadd.f32 0.0, %v436
    %v438 = vpop.f32.mrb[0].mxu0
    %v439 = vadd.f32 0.0, %v438
    %v440 = vpop.f32.mrb[0].mxu0
    %v441 = vadd.f32 0.0, %v440
    %442 = vmatprep.mubr.bf16.mxu0 0
    %443 = vmatmul.mubr.bf16.gmra.mrb[0].mxu0 %v83
    %v444 = vpop.f32.mrb[0].mxu0
    %v445 = vadd.f32 0.0, %v444
    %v446 = vpop.f32.mrb[0].mxu0
    %v447 = vadd.f32 0.0, %v446
    %v448 = vpop.f32.mrb[0].mxu0
    %v449 = vadd.f32 0.0, %v448
    %v450 = vpop.f32.mrb[0].mxu0
    %v451 = vadd.f32 0.0, %v450
    %452 = vdwg.mxu0
    %453 = vmatprep.subr.bf16.mxu0 0
    %454 = vmatpush1.bf16.xpose.msra.mxu0 %v292
    %455 = vmatprep.subr.bf16.mxu0 0
    %456 = vmatpush1.bf16.xpose.msra.mxu0 %v293
    %457 = vmatprep.subr.bf16.mxu0 0
    %458 = vmatpush1.bf16.xpose.msra.mxu0 %v294
    %459 = vmatprep.subr.bf16.mxu0 0
    %460 = vmatpush1.bf16.xpose.msra.mxu0 %v295
    %461 = vmatprep.subr.bf16.mxu0 0
    %462 = vmatpush1.bf16.xpose.msra.mxu0 %v296
    %463 = vmatprep.subr.bf16.mxu0 0
    %464 = vmatpush1.bf16.xpose.msra.mxu0 %v297
    %465 = vmatprep.subr.bf16.mxu0 0
    %466 = vmatpush1.bf16.xpose.msra.mxu0 %v298
    %467 = vmatprep.subr.bf16.mxu0 0
    %468 = vmatpush1.bf16.xpose.msra.mxu0 %v299
    %469 = vmatprep.subr.bf16.mxu0 0
    %470 = vmatpush1.bf16.xpose.msra.mxu0 %v300
    %471 = vmatprep.subr.bf16.mxu0 0
    %472 = vmatpush1.bf16.xpose.msra.mxu0 %v301
    %473 = vmatprep.subr.bf16.mxu0 0
    %474 = vmatpush1.bf16.xpose.msra.mxu0 %v302
    %475 = vmatprep.subr.bf16.mxu0 0
    %476 = vmatpush1.bf16.xpose.msra.mxu0 %v303
    %477 = vmatprep.subr.bf16.mxu0 0
    %478 = vmatpush1.bf16.xpose.msra.mxu0 %v304
    %479 = vmatprep.subr.bf16.mxu0 0
    %480 = vmatpush1.bf16.xpose.msra.mxu0 %v305
    %481 = vmatprep.subr.bf16.mxu0 0
    %482 = vmatpush1.bf16.xpose.msra.mxu0 %v306
    %483 = vmatprep.subr.bf16.mxu0 0
    %484 = vmatpush1.bf16.xpose.msra.mxu0 %v307
    %485 = vmatprep.mubr.bf16.mxu0 0
    %486 = vmatmul.mubr.bf16.gmra.mrb[0].mxu0 %v76
    %v487 = vpop.f32.mrb[0].mxu0
    %v488 = vadd.f32 0.0, %v487
    %v489 = vpop.f32.mrb[0].mxu0
    %v490 = vadd.f32 0.0, %v489
    %v491 = vpop.f32.mrb[0].mxu0
    %v492 = vadd.f32 0.0, %v491
    %v493 = vpop.f32.mrb[0].mxu0
    %v494 = vadd.f32 0.0, %v493
    %495 = vmatprep.mubr.bf16.mxu0 0
    %496 = vmatmul.mubr.bf16.gmra.mrb[0].mxu0 %v77
    %v497 = vpop.f32.mrb[0].mxu0
    %v498 = vadd.f32 0.0, %v497
    %v499 = vpop.f32.mrb[0].mxu0
    %v500 = vadd.f32 0.0, %v499
    %v501 = vpop.f32.mrb[0].mxu0
    %v502 = vadd.f32 0.0, %v501
    %v503 = vpop.f32.mrb[0].mxu0
    %v504 = vadd.f32 0.0, %v503
    %505 = vmatprep.mubr.bf16.mxu0 0
    %506 = vmatmul.mubr.bf16.gmra.mrb[0].mxu0 %v78
    %v507 = vpop.f32.mrb[0].mxu0
    %v508 = vadd.f32 0.0, %v507
    %v509 = vpop.f32.mrb[0].mxu0
    %v510 = vadd.f32 0.0, %v509
    %v511 = vpop.f32.mrb[0].mxu0
    %v512 = vadd.f32 0.0, %v511
    %v513 = vpop.f32.mrb[0].mxu0
    %v514 = vadd.f32 0.0, %v513
    %515 = vmatprep.mubr.bf16.mxu0 0
    %516 = vmatmul.mubr.bf16.gmra.mrb[0].mxu0 %v79
    %v517 = vpop.f32.mrb[0].mxu0
    %v518 = vadd.f32 0.0, %v517
    %v519 = vpop.f32.mrb[0].mxu0
    %v520 = vadd.f32 0.0, %v519
    %v521 = vpop.f32.mrb[0].mxu0
    %v522 = vadd.f32 0.0, %v521
    %v523 = vpop.f32.mrb[0].mxu0
    %v524 = vadd.f32 0.0, %v523
    %525 = vmatprep.mubr.bf16.mxu0 0
    %526 = vmatmul.mubr.bf16.gmra.mrb[0].mxu0 %v80
    %v527 = vpop.f32.mrb[0].mxu0
    %v528 = vadd.f32 0.0, %v527
    %v529 = vpop.f32.mrb[0].mxu0
    %v530 = vadd.f32 0.0, %v529
    %v531 = vpop.f32.mrb[0].mxu0
    %v532 = vadd.f32 0.0, %v531
    %v533 = vpop.f32.mrb[0].mxu0
    %v534 = vadd.f32 0.0, %v533
    %535 = vmatprep.mubr.bf16.mxu0 0
    %536 = vmatmul.mubr.bf16.gmra.mrb[0].mxu0 %v81
    %v537 = vpop.f32.mrb[0].mxu0
    %v538 = vadd.f32 0.0, %v537
    %v539 = vpop.f32.mrb[0].mxu0
    %v540 = vadd.f32 0.0, %v539
    %v541 = vpop.f32.mrb[0].mxu0
    %v542 = vadd.f32 0.0, %v541
    %v543 = vpop.f32.mrb[0].mxu0
    %v544 = vadd.f32 0.0, %v543
    %545 = vmatprep.mubr.bf16.mxu0 0
    %546 = vmatmul.mubr.bf16.gmra.mrb[0].mxu0 %v82
    %v547 = vpop.f32.mrb[0].mxu0
    %v548 = vadd.f32 0.0, %v547
    %v549 = vpop.f32.mrb[0].mxu0
    %v550 = vadd.f32 0.0, %v549
    %v551 = vpop.f32.mrb[0].mxu0
    %v552 = vadd.f32 0.0, %v551
    %v553 = vpop.f32.mrb[0].mxu0
    %v554 = vadd.f32 0.0, %v553
    %555 = vmatprep.mubr.bf16.mxu0 0
    %556 = vmatmul.mubr.bf16.gmra.mrb[0].mxu0 %v83
    %v557 = vpop.f32.mrb[0].mxu0
    %v558 = vadd.f32 0.0, %v557
    %v559 = vpop.f32.mrb[0].mxu0
    %v560 = vadd.f32 0.0, %v559
    %v561 = vpop.f32.mrb[0].mxu0
    %v562 = vadd.f32 0.0, %v561
    %v563 = vpop.f32.mrb[0].mxu0
    %v564 = vadd.f32 0.0, %v563
    %565 = vdwg.mxu0
    %v566 = vld [vmem:[%s3] sm:$0xf]
    %v568 = vlaneseq
    %v569 = vshrl.u32 %v568, 7
    %v570 = vsub.s32 0, %v569
    %v571 = vrot.slane %v566, %v570
    %v572 = vlaneseq
    %v573 = vshrl.u32 %v572, 7
    %v574 = vsub.s32 1, %v573
    %v575 = vrot.slane %v566, %v574
    %v576 = vlaneseq
    %v577 = vshrl.u32 %v576, 7
    %v578 = vsub.s32 2, %v577
    %v579 = vrot.slane %v566, %v578
    %v580 = vlaneseq
    %v581 = vshrl.u32 %v580, 7
    %v582 = vsub.s32 3, %v581
    %v583 = vrot.slane %v566, %v582
    %v588 = vsub.f32 %v571, %v375
    %v589 = vsub.f32 %v575, %v377
    %v590 = vsub.f32 %v579, %v488
    %v591 = vsub.f32 %v583, %v490
    %v592 = vsub.f32 %v571, %v379
    %v593 = vsub.f32 %v575, %v381
    %v594 = vsub.f32 %v579, %v492
    %v595 = vsub.f32 %v583, %v494
    %v596 = vsub.f32 %v571, %v385
    %v597 = vsub.f32 %v575, %v387
    %v598 = vsub.f32 %v579, %v498
    %v599 = vsub.f32 %v583, %v500
    %v600 = vsub.f32 %v571, %v389
    %v601 = vsub.f32 %v575, %v391
    %v602 = vsub.f32 %v579, %v502
    %v603 = vsub.f32 %v583, %v504
    %v604 = vsub.f32 %v571, %v395
    %v605 = vsub.f32 %v575, %v397
    %v606 = vsub.f32 %v579, %v508
    %v607 = vsub.f32 %v583, %v510
    %v608 = vsub.f32 %v571, %v399
    %v609 = vsub.f32 %v575, %v401
    %v610 = vsub.f32 %v579, %v512
    %v611 = vsub.f32 %v583, %v514
    %v612 = vsub.f32 %v571, %v405
    %v613 = vsub.f32 %v575, %v407
    %v614 = vsub.f32 %v579, %v518
    %v615 = vsub.f32 %v583, %v520
    %v616 = vsub.f32 %v571, %v409
    %v617 = vsub.f32 %v575, %v411
    %v618 = vsub.f32 %v579, %v522
    %v619 = vsub.f32 %v583, %v524
    %v620 = vsub.f32 %v571, %v415
    %v621 = vsub.f32 %v575, %v417
    %v622 = vsub.f32 %v579, %v528
    %v623 = vsub.f32 %v583, %v530
    %v624 = vsub.f32 %v571, %v419
    %v625 = vsub.f32 %v575, %v421
    %v626 = vsub.f32 %v579, %v532
    %v627 = vsub.f32 %v583, %v534
    %v628 = vsub.f32 %v571, %v425
    %v629 = vsub.f32 %v575, %v427
    %v630 = vsub.f32 %v579, %v538
    %v631 = vsub.f32 %v583, %v540
    %v632 = vsub.f32 %v571, %v429
    %v633 = vsub.f32 %v575, %v431
    %v634 = vsub.f32 %v579, %v542
    %v635 = vsub.f32 %v583, %v544
    %v636 = vsub.f32 %v571, %v435
    %v637 = vsub.f32 %v575, %v437
    %v638 = vsub.f32 %v579, %v548
    %v639 = vsub.f32 %v583, %v550
    %v640 = vsub.f32 %v571, %v439
    %v641 = vsub.f32 %v575, %v441
    %v642 = vsub.f32 %v579, %v552
    %v643 = vsub.f32 %v583, %v554
    %v644 = vsub.f32 %v571, %v445
    %v645 = vsub.f32 %v575, %v447
    %v646 = vsub.f32 %v579, %v558
    %v647 = vsub.f32 %v583, %v560
    %v648 = vsub.f32 %v571, %v449
    %v649 = vsub.f32 %v575, %v451
    %v650 = vsub.f32 %v579, %v562
    %v651 = vsub.f32 %v583, %v564
    %v652 = vlaneseq
    %v653 = vand.u32 %v652, 127
    %v654 = vadd.s32 %v653, 128
    %vm655 = vcmp.le.f32.partialorder %v588, %v589
    %v656 = vsel %vm655, %v588, %v589
    %v657 = vsel %vm655, %v653, %v654
    %v658 = vadd.s32 %v653, 256
    %vm659 = vcmp.le.f32.partialorder %v656, %v590
    %v660 = vsel %vm659, %v656, %v590
    %v661 = vsel %vm659, %v657, %v658
    %v662 = vadd.s32 %v653, 384
    %vm663 = vcmp.le.f32.partialorder %v660, %v591
    %v664 = vsel %vm663, %v660, %v591
    %v665 = vsel %vm663, %v661, %v662
    %666 = vmin.index.xlane.f32.xlu0 %v664
    %v667 = vpop.xlane.xlu0 %666
    %668 = vset.pattern.permute.xlu0 %v667
    %669 = vperm.xlu0 %668, %v665
    %v670 = vpop.permute.xlu0 %669
    %vm671 = vcmp.le.f32.partialorder %v592, %v593
    %v672 = vsel %vm671, %v592, %v593
    %v673 = vsel %vm671, %v653, %v654
    %vm674 = vcmp.le.f32.partialorder %v672, %v594
    %v675 = vsel %vm674, %v672, %v594
    %v676 = vsel %vm674, %v673, %v658
    %vm677 = vcmp.le.f32.partialorder %v675, %v595
    %v678 = vsel %vm677, %v675, %v595
    %v679 = vsel %vm677, %v676, %v662
    %680 = vmin.index.xlane.f32.xlu0 %v678
    %v681 = vpop.xlane.xlu0 %680
    %682 = vset.pattern.permute.xlu0 %v681
    %683 = vperm.xlu0 %682, %v679
    %v684 = vpop.permute.xlu0 %683
    %vm685 = vcmp.le.f32.partialorder %v596, %v597
    %v686 = vsel %vm685, %v596, %v597
    %v687 = vsel %vm685, %v653, %v654
    %vm688 = vcmp.le.f32.partialorder %v686, %v598
    %v689 = vsel %vm688, %v686, %v598
    %v690 = vsel %vm688, %v687, %v658
    %vm691 = vcmp.le.f32.partialorder %v689, %v599
    %v692 = vsel %vm691, %v689, %v599
    %v693 = vsel %vm691, %v690, %v662
    %694 = vmin.index.xlane.f32.xlu0 %v692
    %v695 = vpop.xlane.xlu0 %694
    %696 = vset.pattern.permute.xlu0 %v695
    %697 = vperm.xlu0 %696, %v693
    %v698 = vpop.permute.xlu0 %697
    %vm699 = vcmp.le.f32.partialorder %v600, %v601
    %v700 = vsel %vm699, %v600, %v601
    %v701 = vsel %vm699, %v653, %v654
    %vm702 = vcmp.le.f32.partialorder %v700, %v602
    %v703 = vsel %vm702, %v700, %v602
    %v704 = vsel %vm702, %v701, %v658
    %vm705 = vcmp.le.f32.partialorder %v703, %v603
    %v706 = vsel %vm705, %v703, %v603
    %v707 = vsel %vm705, %v704, %v662
    %708 = vmin.index.xlane.f32.xlu0 %v706
    %v709 = vpop.xlane.xlu0 %708
    %710 = vset.pattern.permute.xlu0 %v709
    %711 = vperm.xlu0 %710, %v707
    %v712 = vpop.permute.xlu0 %711
    %vm713 = vcmp.le.f32.partialorder %v604, %v605
    %v714 = vsel %vm713, %v604, %v605
    %v715 = vsel %vm713, %v653, %v654
    %vm716 = vcmp.le.f32.partialorder %v714, %v606
    %v717 = vsel %vm716, %v714, %v606
    %v718 = vsel %vm716, %v715, %v658
    %vm719 = vcmp.le.f32.partialorder %v717, %v607
    %v720 = vsel %vm719, %v717, %v607
    %v721 = vsel %vm719, %v718, %v662
    %722 = vmin.index.xlane.f32.xlu0 %v720
    %v723 = vpop.xlane.xlu0 %722
    %724 = vset.pattern.permute.xlu0 %v723
    %725 = vperm.xlu0 %724, %v721
    %v726 = vpop.permute.xlu0 %725
    %vm727 = vcmp.le.f32.partialorder %v608, %v609
    %v728 = vsel %vm727, %v608, %v609
    %v729 = vsel %vm727, %v653, %v654
    %vm730 = vcmp.le.f32.partialorder %v728, %v610
    %v731 = vsel %vm730, %v728, %v610
    %v732 = vsel %vm730, %v729, %v658
    %vm733 = vcmp.le.f32.partialorder %v731, %v611
    %v734 = vsel %vm733, %v731, %v611
    %v735 = vsel %vm733, %v732, %v662
    %736 = vmin.index.xlane.f32.xlu0 %v734
    %v737 = vpop.xlane.xlu0 %736
    %738 = vset.pattern.permute.xlu0 %v737
    %739 = vperm.xlu0 %738, %v735
    %v740 = vpop.permute.xlu0 %739
    %vm741 = vcmp.le.f32.partialorder %v612, %v613
    %v742 = vsel %vm741, %v612, %v613
    %v743 = vsel %vm741, %v653, %v654
    %vm744 = vcmp.le.f32.partialorder %v742, %v614
    %v745 = vsel %vm744, %v742, %v614
    %v746 = vsel %vm744, %v743, %v658
    %vm747 = vcmp.le.f32.partialorder %v745, %v615
    %v748 = vsel %vm747, %v745, %v615
    %v749 = vsel %vm747, %v746, %v662
    %750 = vmin.index.xlane.f32.xlu0 %v748
    %v751 = vpop.xlane.xlu0 %750
    %752 = vset.pattern.permute.xlu0 %v751
    %753 = vperm.xlu0 %752, %v749
    %v754 = vpop.permute.xlu0 %753
    %vm755 = vcmp.le.f32.partialorder %v616, %v617
    %v756 = vsel %vm755, %v616, %v617
    %v757 = vsel %vm755, %v653, %v654
    %vm758 = vcmp.le.f32.partialorder %v756, %v618
    %v759 = vsel %vm758, %v756, %v618
    %v760 = vsel %vm758, %v757, %v658
    %vm761 = vcmp.le.f32.partialorder %v759, %v619
    %v762 = vsel %vm761, %v759, %v619
    %v763 = vsel %vm761, %v760, %v662
    %764 = vmin.index.xlane.f32.xlu0 %v762
    %v765 = vpop.xlane.xlu0 %764
    %766 = vset.pattern.permute.xlu0 %v765
    %767 = vperm.xlu0 %766, %v763
    %v768 = vpop.permute.xlu0 %767
    %vm769 = vcmp.le.f32.partialorder %v620, %v621
    %v770 = vsel %vm769, %v620, %v621
    %v771 = vsel %vm769, %v653, %v654
    %vm772 = vcmp.le.f32.partialorder %v770, %v622
    %v773 = vsel %vm772, %v770, %v622
    %v774 = vsel %vm772, %v771, %v658
    %vm775 = vcmp.le.f32.partialorder %v773, %v623
    %v776 = vsel %vm775, %v773, %v623
    %v777 = vsel %vm775, %v774, %v662
    %778 = vmin.index.xlane.f32.xlu0 %v776
    %v779 = vpop.xlane.xlu0 %778
    %780 = vset.pattern.permute.xlu0 %v779
    %781 = vperm.xlu0 %780, %v777
    %v782 = vpop.permute.xlu0 %781
    %vm783 = vcmp.le.f32.partialorder %v624, %v625
    %v784 = vsel %vm783, %v624, %v625
    %v785 = vsel %vm783, %v653, %v654
    %vm786 = vcmp.le.f32.partialorder %v784, %v626
    %v787 = vsel %vm786, %v784, %v626
    %v788 = vsel %vm786, %v785, %v658
    %vm789 = vcmp.le.f32.partialorder %v787, %v627
    %v790 = vsel %vm789, %v787, %v627
    %v791 = vsel %vm789, %v788, %v662
    %792 = vmin.index.xlane.f32.xlu0 %v790
    %v793 = vpop.xlane.xlu0 %792
    %794 = vset.pattern.permute.xlu0 %v793
    %795 = vperm.xlu0 %794, %v791
    %v796 = vpop.permute.xlu0 %795
    %vm797 = vcmp.le.f32.partialorder %v628, %v629
    %v798 = vsel %vm797, %v628, %v629
    %v799 = vsel %vm797, %v653, %v654
    %vm800 = vcmp.le.f32.partialorder %v798, %v630
    %v801 = vsel %vm800, %v798, %v630
    %v802 = vsel %vm800, %v799, %v658
    %vm803 = vcmp.le.f32.partialorder %v801, %v631
    %v804 = vsel %vm803, %v801, %v631
    %v805 = vsel %vm803, %v802, %v662
    %806 = vmin.index.xlane.f32.xlu0 %v804
    %v807 = vpop.xlane.xlu0 %806
    %808 = vset.pattern.permute.xlu0 %v807
    %809 = vperm.xlu0 %808, %v805
    %v810 = vpop.permute.xlu0 %809
    %vm811 = vcmp.le.f32.partialorder %v632, %v633
    %v812 = vsel %vm811, %v632, %v633
    %v813 = vsel %vm811, %v653, %v654
    %vm814 = vcmp.le.f32.partialorder %v812, %v634
    %v815 = vsel %vm814, %v812, %v634
    %v816 = vsel %vm814, %v813, %v658
    %vm817 = vcmp.le.f32.partialorder %v815, %v635
    %v818 = vsel %vm817, %v815, %v635
    %v819 = vsel %vm817, %v816, %v662
    %820 = vmin.index.xlane.f32.xlu0 %v818
    %v821 = vpop.xlane.xlu0 %820
    %822 = vset.pattern.permute.xlu0 %v821
    %823 = vperm.xlu0 %822, %v819
    %v824 = vpop.permute.xlu0 %823
    %vm825 = vcmp.le.f32.partialorder %v636, %v637
    %v826 = vsel %vm825, %v636, %v637
    %v827 = vsel %vm825, %v653, %v654
    %vm828 = vcmp.le.f32.partialorder %v826, %v638
    %v829 = vsel %vm828, %v826, %v638
    %v830 = vsel %vm828, %v827, %v658
    %vm831 = vcmp.le.f32.partialorder %v829, %v639
    %v832 = vsel %vm831, %v829, %v639
    %v833 = vsel %vm831, %v830, %v662
    %834 = vmin.index.xlane.f32.xlu0 %v832
    %v835 = vpop.xlane.xlu0 %834
    %836 = vset.pattern.permute.xlu0 %v835
    %837 = vperm.xlu0 %836, %v833
    %v838 = vpop.permute.xlu0 %837
    %vm839 = vcmp.le.f32.partialorder %v640, %v641
    %v840 = vsel %vm839, %v640, %v641
    %v841 = vsel %vm839, %v653, %v654
    %vm842 = vcmp.le.f32.partialorder %v840, %v642
    %v843 = vsel %vm842, %v840, %v642
    %v844 = vsel %vm842, %v841, %v658
    %vm845 = vcmp.le.f32.partialorder %v843, %v643
    %v846 = vsel %vm845, %v843, %v643
    %v847 = vsel %vm845, %v844, %v662
    %848 = vmin.index.xlane.f32.xlu0 %v846
    %v849 = vpop.xlane.xlu0 %848
    %850 = vset.pattern.permute.xlu0 %v849
    %851 = vperm.xlu0 %850, %v847
    %v852 = vpop.permute.xlu0 %851
    %vm853 = vcmp.le.f32.partialorder %v644, %v645
    %v854 = vsel %vm853, %v644, %v645
    %v855 = vsel %vm853, %v653, %v654
    %vm856 = vcmp.le.f32.partialorder %v854, %v646
    %v857 = vsel %vm856, %v854, %v646
    %v858 = vsel %vm856, %v855, %v658
    %vm859 = vcmp.le.f32.partialorder %v857, %v647
    %v860 = vsel %vm859, %v857, %v647
    %v861 = vsel %vm859, %v858, %v662
    %862 = vmin.index.xlane.f32.xlu0 %v860
    %v863 = vpop.xlane.xlu0 %862
    %864 = vset.pattern.permute.xlu0 %v863
    %865 = vperm.xlu0 %864, %v861
    %v866 = vpop.permute.xlu0 %865
    %vm867 = vcmp.le.f32.partialorder %v648, %v649
    %v868 = vsel %vm867, %v648, %v649
    %v869 = vsel %vm867, %v653, %v654
    %vm870 = vcmp.le.f32.partialorder %v868, %v650
    %v871 = vsel %vm870, %v868, %v650
    %v872 = vsel %vm870, %v869, %v658
    %vm873 = vcmp.le.f32.partialorder %v871, %v651
    %v874 = vsel %vm873, %v871, %v651
    %v875 = vsel %vm873, %v872, %v662
    %876 = vmin.index.xlane.f32.xlu0 %v874
    %v877 = vpop.xlane.xlu0 %876
    %878 = vset.pattern.permute.xlu0 %v877
    %879 = vperm.xlu0 %878, %v875
    %v880 = vpop.permute.xlu0 %879
    %vm881 = vcmp.eq.s32.totalorder %v653, %v670
    %vm882 = vcmp.eq.s32.totalorder %v654, %v670
    %vm883 = vcmp.eq.s32.totalorder %v658, %v670
    %vm884 = vcmp.eq.s32.totalorder %v662, %v670
    %vm885 = vcmp.eq.s32.totalorder %v653, %v684
    %vm886 = vcmp.eq.s32.totalorder %v654, %v684
    %vm887 = vcmp.eq.s32.totalorder %v658, %v684
    %vm888 = vcmp.eq.s32.totalorder %v662, %v684
    %vm889 = vcmp.eq.s32.totalorder %v653, %v698
    %vm890 = vcmp.eq.s32.totalorder %v654, %v698
    %vm891 = vcmp.eq.s32.totalorder %v658, %v698
    %vm892 = vcmp.eq.s32.totalorder %v662, %v698
    %vm893 = vcmp.eq.s32.totalorder %v653, %v712
    %vm894 = vcmp.eq.s32.totalorder %v654, %v712
    %vm895 = vcmp.eq.s32.totalorder %v658, %v712
    %vm896 = vcmp.eq.s32.totalorder %v662, %v712
    %vm897 = vcmp.eq.s32.totalorder %v653, %v726
    %vm898 = vcmp.eq.s32.totalorder %v654, %v726
    %vm899 = vcmp.eq.s32.totalorder %v658, %v726
    %vm900 = vcmp.eq.s32.totalorder %v662, %v726
    %vm901 = vcmp.eq.s32.totalorder %v653, %v740
    %vm902 = vcmp.eq.s32.totalorder %v654, %v740
    %vm903 = vcmp.eq.s32.totalorder %v658, %v740
    %vm904 = vcmp.eq.s32.totalorder %v662, %v740
    %vm905 = vcmp.eq.s32.totalorder %v653, %v754
    %vm906 = vcmp.eq.s32.totalorder %v654, %v754
    %vm907 = vcmp.eq.s32.totalorder %v658, %v754
    %vm908 = vcmp.eq.s32.totalorder %v662, %v754
    %vm909 = vcmp.eq.s32.totalorder %v653, %v768
    %vm910 = vcmp.eq.s32.totalorder %v654, %v768
    %vm911 = vcmp.eq.s32.totalorder %v658, %v768
    %vm912 = vcmp.eq.s32.totalorder %v662, %v768
    %vm913 = vcmp.eq.s32.totalorder %v653, %v782
    %vm914 = vcmp.eq.s32.totalorder %v654, %v782
    %vm915 = vcmp.eq.s32.totalorder %v658, %v782
    %vm916 = vcmp.eq.s32.totalorder %v662, %v782
    %vm917 = vcmp.eq.s32.totalorder %v653, %v796
    %vm918 = vcmp.eq.s32.totalorder %v654, %v796
    %vm919 = vcmp.eq.s32.totalorder %v658, %v796
    %vm920 = vcmp.eq.s32.totalorder %v662, %v796
    %vm921 = vcmp.eq.s32.totalorder %v653, %v810
    %vm922 = vcmp.eq.s32.totalorder %v654, %v810
    %vm923 = vcmp.eq.s32.totalorder %v658, %v810
    %vm924 = vcmp.eq.s32.totalorder %v662, %v810
    %vm925 = vcmp.eq.s32.totalorder %v653, %v824
    %vm926 = vcmp.eq.s32.totalorder %v654, %v824
    %vm927 = vcmp.eq.s32.totalorder %v658, %v824
    %vm928 = vcmp.eq.s32.totalorder %v662, %v824
    %vm929 = vcmp.eq.s32.totalorder %v653, %v838
    %vm930 = vcmp.eq.s32.totalorder %v654, %v838
    %vm931 = vcmp.eq.s32.totalorder %v658, %v838
    %vm932 = vcmp.eq.s32.totalorder %v662, %v838
    %vm933 = vcmp.eq.s32.totalorder %v653, %v852
    %vm934 = vcmp.eq.s32.totalorder %v654, %v852
    %vm935 = vcmp.eq.s32.totalorder %v658, %v852
    %vm936 = vcmp.eq.s32.totalorder %v662, %v852
    %vm937 = vcmp.eq.s32.totalorder %v653, %v866
    %vm938 = vcmp.eq.s32.totalorder %v654, %v866
    %vm939 = vcmp.eq.s32.totalorder %v658, %v866
    %vm940 = vcmp.eq.s32.totalorder %v662, %v866
    %vm941 = vcmp.eq.s32.totalorder %v653, %v880
    %vm942 = vcmp.eq.s32.totalorder %v654, %v880
    %vm943 = vcmp.eq.s32.totalorder %v658, %v880
    %vm944 = vcmp.eq.s32.totalorder %v662, %v880
    %v945 = vsel %vm881, 1, 0
    %v946 = vsel %vm882, 1, 0
    %v947 = vsel %vm883, 1, 0
    %v948 = vsel %vm884, 1, 0
    %v949 = vsel %vm885, 1, 0
    %v950 = vsel %vm886, 1, 0
    %v951 = vsel %vm887, 1, 0
    %v952 = vsel %vm888, 1, 0
    %v953 = vsel %vm889, 1, 0
    %v954 = vsel %vm890, 1, 0
    %v955 = vsel %vm891, 1, 0
    %v956 = vsel %vm892, 1, 0
    %v957 = vsel %vm893, 1, 0
    %v958 = vsel %vm894, 1, 0
    %v959 = vsel %vm895, 1, 0
    %v960 = vsel %vm896, 1, 0
    %v961 = vsel %vm897, 1, 0
    %v962 = vsel %vm898, 1, 0
    %v963 = vsel %vm899, 1, 0
    %v964 = vsel %vm900, 1, 0
    %v965 = vsel %vm901, 1, 0
    %v966 = vsel %vm902, 1, 0
    %v967 = vsel %vm903, 1, 0
    %v968 = vsel %vm904, 1, 0
    %v969 = vsel %vm905, 1, 0
    %v970 = vsel %vm906, 1, 0
    %v971 = vsel %vm907, 1, 0
    %v972 = vsel %vm908, 1, 0
    %v973 = vsel %vm909, 1, 0
    %v974 = vsel %vm910, 1, 0
    %v975 = vsel %vm911, 1, 0
    %v976 = vsel %vm912, 1, 0
    %v977 = vsel %vm913, 1, 0
    %v978 = vsel %vm914, 1, 0
    %v979 = vsel %vm915, 1, 0
    %v980 = vsel %vm916, 1, 0
    %v981 = vsel %vm917, 1, 0
    %v982 = vsel %vm918, 1, 0
    %v983 = vsel %vm919, 1, 0
    %v984 = vsel %vm920, 1, 0
    %v985 = vsel %vm921, 1, 0
    %v986 = vsel %vm922, 1, 0
    %v987 = vsel %vm923, 1, 0
    %v988 = vsel %vm924, 1, 0
    %v989 = vsel %vm925, 1, 0
    %v990 = vsel %vm926, 1, 0
    %v991 = vsel %vm927, 1, 0
    %v992 = vsel %vm928, 1, 0
    %v993 = vsel %vm929, 1, 0
    %v994 = vsel %vm930, 1, 0
    %v995 = vsel %vm931, 1, 0
    %v996 = vsel %vm932, 1, 0
    %v997 = vsel %vm933, 1, 0
    %v998 = vsel %vm934, 1, 0
    %v999 = vsel %vm935, 1, 0
    %v1000 = vsel %vm936, 1, 0
    %v1001 = vsel %vm937, 1, 0
    %v1002 = vsel %vm938, 1, 0
    %v1003 = vsel %vm939, 1, 0
    %v1004 = vsel %vm940, 1, 0
    %v1005 = vsel %vm941, 1, 0
    %v1006 = vsel %vm942, 1, 0
    %v1007 = vsel %vm943, 1, 0
    %v1008 = vsel %vm944, 1, 0
    %v1009 = vcvt.s32.f32 %v945
    %v1010 = vcvt.s32.f32 %v946
    %v1011 = vcvt.s32.f32 %v947
    %v1012 = vcvt.s32.f32 %v948
    %v1013 = vcvt.s32.f32 %v949
    %v1014 = vcvt.s32.f32 %v950
    %v1015 = vcvt.s32.f32 %v951
    %v1016 = vcvt.s32.f32 %v952
    %v1017 = vcvt.s32.f32 %v953
    %v1018 = vcvt.s32.f32 %v954
    %v1019 = vcvt.s32.f32 %v955
    %v1020 = vcvt.s32.f32 %v956
    %v1021 = vcvt.s32.f32 %v957
    %v1022 = vcvt.s32.f32 %v958
    %v1023 = vcvt.s32.f32 %v959
    %v1024 = vcvt.s32.f32 %v960
    %v1025 = vcvt.s32.f32 %v961
    %v1026 = vcvt.s32.f32 %v962
    %v1027 = vcvt.s32.f32 %v963
    %v1028 = vcvt.s32.f32 %v964
    %v1029 = vcvt.s32.f32 %v965
    %v1030 = vcvt.s32.f32 %v966
    %v1031 = vcvt.s32.f32 %v967
    %v1032 = vcvt.s32.f32 %v968
    %v1033 = vcvt.s32.f32 %v969
    %v1034 = vcvt.s32.f32 %v970
    %v1035 = vcvt.s32.f32 %v971
    %v1036 = vcvt.s32.f32 %v972
    %v1037 = vcvt.s32.f32 %v973
    %v1038 = vcvt.s32.f32 %v974
    %v1039 = vcvt.s32.f32 %v975
    %v1040 = vcvt.s32.f32 %v976
    %v1041 = vcvt.s32.f32 %v977
    %v1042 = vcvt.s32.f32 %v978
    %v1043 = vcvt.s32.f32 %v979
    %v1044 = vcvt.s32.f32 %v980
    %v1045 = vcvt.s32.f32 %v981
    %v1046 = vcvt.s32.f32 %v982
    %v1047 = vcvt.s32.f32 %v983
    %v1048 = vcvt.s32.f32 %v984
    %v1049 = vcvt.s32.f32 %v985
    %v1050 = vcvt.s32.f32 %v986
    %v1051 = vcvt.s32.f32 %v987
    %v1052 = vcvt.s32.f32 %v988
    %v1053 = vcvt.s32.f32 %v989
    %v1054 = vcvt.s32.f32 %v990
    %v1055 = vcvt.s32.f32 %v991
    %v1056 = vcvt.s32.f32 %v992
    %v1057 = vcvt.s32.f32 %v993
    %v1058 = vcvt.s32.f32 %v994
    %v1059 = vcvt.s32.f32 %v995
    %v1060 = vcvt.s32.f32 %v996
    %v1061 = vcvt.s32.f32 %v997
    %v1062 = vcvt.s32.f32 %v998
    %v1063 = vcvt.s32.f32 %v999
    %v1064 = vcvt.s32.f32 %v1000
    %v1065 = vcvt.s32.f32 %v1001
    %v1066 = vcvt.s32.f32 %v1002
    %v1067 = vcvt.s32.f32 %v1003
    %v1068 = vcvt.s32.f32 %v1004
    %v1069 = vcvt.s32.f32 %v1005
    %v1070 = vcvt.s32.f32 %v1006
    %v1071 = vcvt.s32.f32 %v1007
    %v1072 = vcvt.s32.f32 %v1008
    %v1073 = vpack.c.bf16 %v1013, %v1009
    %v1074 = vpack.c.bf16 %v1014, %v1010
    %v1075 = vpack.c.bf16 %v1015, %v1011
    %v1076 = vpack.c.bf16 %v1016, %v1012
    %v1077 = vpack.c.bf16 %v1021, %v1017
    %v1078 = vpack.c.bf16 %v1022, %v1018
    %v1079 = vpack.c.bf16 %v1023, %v1019
    %v1080 = vpack.c.bf16 %v1024, %v1020
    %v1081 = vpack.c.bf16 %v1029, %v1025
    %v1082 = vpack.c.bf16 %v1030, %v1026
    %v1083 = vpack.c.bf16 %v1031, %v1027
    %v1084 = vpack.c.bf16 %v1032, %v1028
    %v1085 = vpack.c.bf16 %v1037, %v1033
    %v1086 = vpack.c.bf16 %v1038, %v1034
    %v1087 = vpack.c.bf16 %v1039, %v1035
    %v1088 = vpack.c.bf16 %v1040, %v1036
    %v1089 = vpack.c.bf16 %v1045, %v1041
    %v1090 = vpack.c.bf16 %v1046, %v1042
    %v1091 = vpack.c.bf16 %v1047, %v1043
    %v1092 = vpack.c.bf16 %v1048, %v1044
    %v1093 = vpack.c.bf16 %v1053, %v1049
    %v1094 = vpack.c.bf16 %v1054, %v1050
    %v1095 = vpack.c.bf16 %v1055, %v1051
    %v1096 = vpack.c.bf16 %v1056, %v1052
    %v1097 = vpack.c.bf16 %v1061, %v1057
    %v1098 = vpack.c.bf16 %v1062, %v1058
    %v1099 = vpack.c.bf16 %v1063, %v1059
    %v1100 = vpack.c.bf16 %v1064, %v1060
    %v1101 = vpack.c.bf16 %v1069, %v1065
    %v1102 = vpack.c.bf16 %v1070, %v1066
    %v1103 = vpack.c.bf16 %v1071, %v1067
    %v1104 = vpack.c.bf16 %v1072, %v1068
    %v1105 = vld [vmem:[#allocation7] sm:$0xf]
    %v1106 = vld [vmem:[#allocation7 + $0x4] sm:$0xf]
    %v1107 = vld [vmem:[#allocation7 + $0x8] sm:$0xf]
    %v1108 = vld [vmem:[#allocation7 + $0xc] sm:$0xf]
    %v1109 = vld [vmem:[#allocation7 + $0x10] sm:$0xf]
    %v1110 = vld [vmem:[#allocation7 + $0x14] sm:$0xf]
    %v1111 = vld [vmem:[#allocation7 + $0x18] sm:$0xf]
    %v1112 = vld [vmem:[#allocation7 + $0x1c] sm:$0xf]
    %v1113 = vld [vmem:[#allocation7 + $0x20] sm:$0xf]
    %v1114 = vld [vmem:[#allocation7 + $0x24] sm:$0xf]
    %v1115 = vld [vmem:[#allocation7 + $0x28] sm:$0xf]
    %v1116 = vld [vmem:[#allocation7 + $0x2c] sm:$0xf]
    %v1117 = vld [vmem:[#allocation7 + $0x30] sm:$0xf]
    %v1118 = vld [vmem:[#allocation7 + $0x34] sm:$0xf]
    %v1119 = vld [vmem:[#allocation7 + $0x38] sm:$0xf]
    %v1120 = vld [vmem:[#allocation7 + $0x3c] sm:$0xf]
    %v1121 = vld [vmem:[#allocation7 + $0x40] sm:$0xf]
    %v1122 = vld [vmem:[#allocation7 + $0x44] sm:$0xf]
    %v1123 = vld [vmem:[#allocation7 + $0x48] sm:$0xf]
    %v1124 = vld [vmem:[#allocation7 + $0x4c] sm:$0xf]
    %v1125 = vld [vmem:[#allocation7 + $0x50] sm:$0xf]
    %v1126 = vld [vmem:[#allocation7 + $0x54] sm:$0xf]
    %v1127 = vld [vmem:[#allocation7 + $0x58] sm:$0xf]
    %v1128 = vld [vmem:[#allocation7 + $0x5c] sm:$0xf]
    %v1129 = vld [vmem:[#allocation7 + $0x60] sm:$0xf]
    %v1130 = vld [vmem:[#allocation7 + $0x64] sm:$0xf]
    %v1131 = vld [vmem:[#allocation7 + $0x68] sm:$0xf]
    %v1132 = vld [vmem:[#allocation7 + $0x6c] sm:$0xf]
    %v1133 = vld [vmem:[#allocation7 + $0x70] sm:$0xf]
    %v1134 = vld [vmem:[#allocation7 + $0x74] sm:$0xf]
    %v1135 = vld [vmem:[#allocation7 + $0x78] sm:$0xf]
    %v1136 = vld [vmem:[#allocation7 + $0x7c] sm:$0xf]
    %v1137 = vld [vmem:[#allocation7 + $0x80] sm:$0xf]
    %v1138 = vld [vmem:[#allocation7 + $0x84] sm:$0xf]
    %v1139 = vld [vmem:[#allocation7 + $0x88] sm:$0xf]
    %v1140 = vld [vmem:[#allocation7 + $0x8c] sm:$0xf]
    %v1141 = vld [vmem:[#allocation7 + $0x90] sm:$0xf]
    %v1142 = vld [vmem:[#allocation7 + $0x94] sm:$0xf]
    %v1143 = vld [vmem:[#allocation7 + $0x98] sm:$0xf]
    %v1144 = vld [vmem:[#allocation7 + $0x9c] sm:$0xf]
    %v1145 = vld [vmem:[#allocation7 + $0xa0] sm:$0xf]
    %v1146 = vld [vmem:[#allocation7 + $0xa4] sm:$0xf]
    %v1147 = vld [vmem:[#allocation7 + $0xa8] sm:$0xf]
    %v1148 = vld [vmem:[#allocation7 + $0xac] sm:$0xf]
    %v1149 = vld [vmem:[#allocation7 + $0xb0] sm:$0xf]
    %v1150 = vld [vmem:[#allocation7 + $0xb4] sm:$0xf]
    %v1151 = vld [vmem:[#allocation7 + $0xb8] sm:$0xf]
    %v1152 = vld [vmem:[#allocation7 + $0xbc] sm:$0xf]
    %v1153 = vld [vmem:[#allocation7 + $0xc0] sm:$0xf]
    %v1154 = vld [vmem:[#allocation7 + $0xc4] sm:$0xf]
    %v1155 = vld [vmem:[#allocation7 + $0xc8] sm:$0xf]
    %v1156 = vld [vmem:[#allocation7 + $0xcc] sm:$0xf]
    %v1157 = vld [vmem:[#allocation7 + $0xd0] sm:$0xf]
    %v1158 = vld [vmem:[#allocation7 + $0xd4] sm:$0xf]
    %v1159 = vld [vmem:[#allocation7 + $0xd8] sm:$0xf]
    %v1160 = vld [vmem:[#allocation7 + $0xdc] sm:$0xf]
    %v1161 = vld [vmem:[#allocation7 + $0xe0] sm:$0xf]
    %v1162 = vld [vmem:[#allocation7 + $0xe4] sm:$0xf]
    %v1163 = vld [vmem:[#allocation7 + $0xe8] sm:$0xf]
    %v1164 = vld [vmem:[#allocation7 + $0xec] sm:$0xf]
    %v1165 = vld [vmem:[#allocation7 + $0xf0] sm:$0xf]
    %v1166 = vld [vmem:[#allocation7 + $0xf4] sm:$0xf]
    %v1167 = vld [vmem:[#allocation7 + $0xf8] sm:$0xf]
    %v1168 = vld [vmem:[#allocation7 + $0xfc] sm:$0xf]
    %v1233 = vunpack.c.l.b16 %v1105
    %v1234 = vunpack.c.l.b16 %v1106
    %v1235 = vunpack.c.l.b16 %v1107
    %v1236 = vunpack.c.l.b16 %v1108
    %v1237 = vunpack.c.l.b16 %v1109
    %v1238 = vunpack.c.l.b16 %v1110
    %v1239 = vunpack.c.l.b16 %v1111
    %v1240 = vunpack.c.l.b16 %v1112
    %v1241 = vunpack.c.l.b16 %v1113
    %v1242 = vunpack.c.l.b16 %v1114
    %v1243 = vunpack.c.l.b16 %v1115
    %v1244 = vunpack.c.l.b16 %v1116
    %v1245 = vunpack.c.l.b16 %v1117
    %v1246 = vunpack.c.l.b16 %v1118
    %v1247 = vunpack.c.l.b16 %v1119
    %v1248 = vunpack.c.l.b16 %v1120
    %v1249 = vunpack.c.l.b16 %v1121
    %v1250 = vunpack.c.l.b16 %v1122
    %v1251 = vunpack.c.l.b16 %v1123
    %v1252 = vunpack.c.l.b16 %v1124
    %v1253 = vunpack.c.l.b16 %v1125
    %v1254 = vunpack.c.l.b16 %v1126
    %v1255 = vunpack.c.l.b16 %v1127
    %v1256 = vunpack.c.l.b16 %v1128
    %v1257 = vunpack.c.l.b16 %v1129
    %v1258 = vunpack.c.l.b16 %v1130
    %v1259 = vunpack.c.l.b16 %v1131
    %v1260 = vunpack.c.l.b16 %v1132
    %v1261 = vunpack.c.l.b16 %v1133
    %v1262 = vunpack.c.l.b16 %v1134
    %v1263 = vunpack.c.l.b16 %v1135
    %v1264 = vunpack.c.l.b16 %v1136
    %v1265 = vunpack.c.l.b16 %v1137
    %v1266 = vunpack.c.l.b16 %v1138
    %v1267 = vunpack.c.l.b16 %v1139
    %v1268 = vunpack.c.l.b16 %v1140
    %v1269 = vunpack.c.l.b16 %v1141
    %v1270 = vunpack.c.l.b16 %v1142
    %v1271 = vunpack.c.l.b16 %v1143
    %v1272 = vunpack.c.l.b16 %v1144
    %v1273 = vunpack.c.l.b16 %v1145
    %v1274 = vunpack.c.l.b16 %v1146
    %v1275 = vunpack.c.l.b16 %v1147
    %v1276 = vunpack.c.l.b16 %v1148
    %v1277 = vunpack.c.l.b16 %v1149
    %v1278 = vunpack.c.l.b16 %v1150
    %v1279 = vunpack.c.l.b16 %v1151
    %v1280 = vunpack.c.l.b16 %v1152
    %v1281 = vunpack.c.l.b16 %v1153
    %v1282 = vunpack.c.l.b16 %v1154
    %v1283 = vunpack.c.l.b16 %v1155
    %v1284 = vunpack.c.l.b16 %v1156
    %v1285 = vunpack.c.l.b16 %v1157
    %v1286 = vunpack.c.l.b16 %v1158
    %v1287 = vunpack.c.l.b16 %v1159
    %v1288 = vunpack.c.l.b16 %v1160
    %v1289 = vunpack.c.l.b16 %v1161
    %v1290 = vunpack.c.l.b16 %v1162
    %v1291 = vunpack.c.l.b16 %v1163
    %v1292 = vunpack.c.l.b16 %v1164
    %v1293 = vunpack.c.l.b16 %v1165
    %v1294 = vunpack.c.l.b16 %v1166
    %v1295 = vunpack.c.l.b16 %v1167
    %v1296 = vunpack.c.l.b16 %v1168
    %v1297 = vpack.c.b16 %v1234, %v1233
    %v1298 = vpack.c.b16 %v1236, %v1235
    %v1299 = vpack.c.b16 %v1238, %v1237
    %v1300 = vpack.c.b16 %v1240, %v1239
    %v1301 = vpack.c.b16 %v1242, %v1241
    %v1302 = vpack.c.b16 %v1244, %v1243
    %v1303 = vpack.c.b16 %v1246, %v1245
    %v1304 = vpack.c.b16 %v1248, %v1247
    %v1305 = vpack.c.b16 %v1250, %v1249
    %v1306 = vpack.c.b16 %v1252, %v1251
    %v1307 = vpack.c.b16 %v1254, %v1253
    %v1308 = vpack.c.b16 %v1256, %v1255
    %v1309 = vpack.c.b16 %v1258, %v1257
    %v1310 = vpack.c.b16 %v1260, %v1259
    %v1311 = vpack.c.b16 %v1262, %v1261
    %v1312 = vpack.c.b16 %v1264, %v1263
    %v1313 = vpack.c.b16 %v1266, %v1265
    %v1314 = vpack.c.b16 %v1268, %v1267
    %v1315 = vpack.c.b16 %v1270, %v1269
    %v1316 = vpack.c.b16 %v1272, %v1271
    %v1317 = vpack.c.b16 %v1274, %v1273
    %v1318 = vpack.c.b16 %v1276, %v1275
    %v1319 = vpack.c.b16 %v1278, %v1277
    %v1320 = vpack.c.b16 %v1280, %v1279
    %v1321 = vpack.c.b16 %v1282, %v1281
    %v1322 = vpack.c.b16 %v1284, %v1283
    %v1323 = vpack.c.b16 %v1286, %v1285
    %v1324 = vpack.c.b16 %v1288, %v1287
    %v1325 = vpack.c.b16 %v1290, %v1289
    %v1326 = vpack.c.b16 %v1292, %v1291
    %v1327 = vpack.c.b16 %v1294, %v1293
    %v1328 = vpack.c.b16 %v1296, %v1295
    %1361 = vmatprep.subr.bf16.mxu0 0
    %1362 = vmatpush1.bf16.msra.mxu0 %v1297
    %1363 = vmatprep.subr.bf16.mxu0 0
    %1364 = vmatpush1.bf16.msra.mxu0 %v1298
    %1365 = vmatprep.subr.bf16.mxu0 0
    %1366 = vmatpush1.bf16.msra.mxu0 %v1299
    %1367 = vmatprep.subr.bf16.mxu0 0
    %1368 = vmatpush1.bf16.msra.mxu0 %v1300
    %1369 = vmatprep.subr.bf16.mxu0 0
    %1370 = vmatpush1.bf16.msra.mxu0 %v1301
    %1371 = vmatprep.subr.bf16.mxu0 0
    %1372 = vmatpush1.bf16.msra.mxu0 %v1302
    %1373 = vmatprep.subr.bf16.mxu0 0
    %1374 = vmatpush1.bf16.msra.mxu0 %v1303
    %1375 = vmatprep.subr.bf16.mxu0 0
    %1376 = vmatpush1.bf16.msra.mxu0 %v1304
    %1377 = vmatprep.subr.bf16.mxu0 0
    %1378 = vmatpush1.bf16.msra.mxu0 %v1305
    %1379 = vmatprep.subr.bf16.mxu0 0
    %1380 = vmatpush1.bf16.msra.mxu0 %v1306
    %1381 = vmatprep.subr.bf16.mxu0 0
    %1382 = vmatpush1.bf16.msra.mxu0 %v1307
    %1383 = vmatprep.subr.bf16.mxu0 0
    %1384 = vmatpush1.bf16.msra.mxu0 %v1308
    %1385 = vmatprep.subr.bf16.mxu0 0
    %1386 = vmatpush1.bf16.msra.mxu0 %v1309
    %1387 = vmatprep.subr.bf16.mxu0 0
    %1388 = vmatpush1.bf16.msra.mxu0 %v1310
    %1389 = vmatprep.subr.bf16.mxu0 0
    %1390 = vmatpush1.bf16.msra.mxu0 %v1311
    %1391 = vmatprep.subr.bf16.mxu0 0
    %1392 = vmatpush1.bf16.msra.mxu0 %v1312
    %1393 = vmatprep.mubr.bf16.mxu0 %v1074
    %1394 = vmatmul.mubr.bf16.gmra.mrb[0].mxu0 %v1073
    %v1395 = vpop.f32.mrb[0].mxu0
    %v1396 = vadd.f32 0.0, %v1395
    %v1397 = vpop.f32.mrb[0].mxu0
    %v1398 = vpop.f32.mrb[0].mxu0
    %v1399 = vadd.f32 0.0, %v1398
    %v1400 = vpop.f32.mrb[0].mxu0
    %1401 = vmatprep.mubr.bf16.mxu0 %v1078
    %1402 = vmatmul.mubr.bf16.gmra.mrb[0].mxu0 %v1077
    %v1403 = vpop.f32.mrb[0].mxu0
    %v1404 = vadd.f32 0.0, %v1403
    %v1405 = vpop.f32.mrb[0].mxu0
    %v1406 = vpop.f32.mrb[0].mxu0
    %v1407 = vadd.f32 0.0, %v1406
    %v1408 = vpop.f32.mrb[0].mxu0
    %1409 = vmatprep.mubr.bf16.mxu0 %v1082
    %1410 = vmatmul.mubr.bf16.gmra.mrb[0].mxu0 %v1081
    %v1411 = vpop.f32.mrb[0].mxu0
    %v1412 = vadd.f32 0.0, %v1411
    %v1413 = vpop.f32.mrb[0].mxu0
    %v1414 = vpop.f32.mrb[0].mxu0
    %v1415 = vadd.f32 0.0, %v1414
    %v1416 = vpop.f32.mrb[0].mxu0
    %1417 = vmatprep.mubr.bf16.mxu0 %v1086
    %1418 = vmatmul.mubr.bf16.gmra.mrb[0].mxu0 %v1085
    %v1419 = vpop.f32.mrb[0].mxu0
    %v1420 = vadd.f32 0.0, %v1419
    %v1421 = vpop.f32.mrb[0].mxu0
    %v1422 = vpop.f32.mrb[0].mxu0
    %v1423 = vadd.f32 0.0, %v1422
    %v1424 = vpop.f32.mrb[0].mxu0
    %1425 = vmatprep.mubr.bf16.mxu0 %v1090
    %1426 = vmatmul.mubr.bf16.gmra.mrb[0].mxu0 %v1089
    %v1427 = vpop.f32.mrb[0].mxu0
    %v1428 = vadd.f32 0.0, %v1427
    %v1429 = vpop.f32.mrb[0].mxu0
    %v1430 = vpop.f32.mrb[0].mxu0
    %v1431 = vadd.f32 0.0, %v1430
    %v1432 = vpop.f32.mrb[0].mxu0
    %1433 = vmatprep.mubr.bf16.mxu0 %v1094
    %1434 = vmatmul.mubr.bf16.gmra.mrb[0].mxu0 %v1093
    %v1435 = vpop.f32.mrb[0].mxu0
    %v1436 = vadd.f32 0.0, %v1435
    %v1437 = vpop.f32.mrb[0].mxu0
    %v1438 = vpop.f32.mrb[0].mxu0
    %v1439 = vadd.f32 0.0, %v1438
    %v1440 = vpop.f32.mrb[0].mxu0
    %1441 = vmatprep.mubr.bf16.mxu0 %v1098
    %1442 = vmatmul.mubr.bf16.gmra.mrb[0].mxu0 %v1097
    %v1443 = vpop.f32.mrb[0].mxu0
    %v1444 = vadd.f32 0.0, %v1443
    %v1445 = vpop.f32.mrb[0].mxu0
    %v1446 = vpop.f32.mrb[0].mxu0
    %v1447 = vadd.f32 0.0, %v1446
    %v1448 = vpop.f32.mrb[0].mxu0
    %1449 = vmatprep.mubr.bf16.mxu0 %v1102
    %1450 = vmatmul.mubr.bf16.gmra.mrb[0].mxu0 %v1101
    %v1451 = vpop.f32.mrb[0].mxu0
    %v1452 = vadd.f32 0.0, %v1451
    %v1453 = vpop.f32.mrb[0].mxu0
    %v1454 = vpop.f32.mrb[0].mxu0
    %v1455 = vadd.f32 0.0, %v1454
    %v1456 = vpop.f32.mrb[0].mxu0
    %1457 = vdwg.mxu0
    %1458 = vmatprep.subr.bf16.mxu0 0
    %1459 = vmatpush1.bf16.msra.mxu0 %v1313
    %1460 = vmatprep.subr.bf16.mxu0 0
    %1461 = vmatpush1.bf16.msra.mxu0 %v1314
    %1462 = vmatprep.subr.bf16.mxu0 0
    %1463 = vmatpush1.bf16.msra.mxu0 %v1315
    %1464 = vmatprep.subr.bf16.mxu0 0
    %1465 = vmatpush1.bf16.msra.mxu0 %v1316
    %1466 = vmatprep.subr.bf16.mxu0 0
    %1467 = vmatpush1.bf16.msra.mxu0 %v1317
    %1468 = vmatprep.subr.bf16.mxu0 0
    %1469 = vmatpush1.bf16.msra.mxu0 %v1318
    %1470 = vmatprep.subr.bf16.mxu0 0
    %1471 = vmatpush1.bf16.msra.mxu0 %v1319
    %1472 = vmatprep.subr.bf16.mxu0 0
    %1473 = vmatpush1.bf16.msra.mxu0 %v1320
    %1474 = vmatprep.subr.bf16.mxu0 0
    %1475 = vmatpush1.bf16.msra.mxu0 %v1321
    %1476 = vmatprep.subr.bf16.mxu0 0
    %1477 = vmatpush1.bf16.msra.mxu0 %v1322
    %1478 = vmatprep.subr.bf16.mxu0 0
    %1479 = vmatpush1.bf16.msra.mxu0 %v1323
    %1480 = vmatprep.subr.bf16.mxu0 0
    %1481 = vmatpush1.bf16.msra.mxu0 %v1324
    %1482 = vmatprep.subr.bf16.mxu0 0
    %1483 = vmatpush1.bf16.msra.mxu0 %v1325
    %1484 = vmatprep.subr.bf16.mxu0 0
    %1485 = vmatpush1.bf16.msra.mxu0 %v1326
    %1486 = vmatprep.subr.bf16.mxu0 0
    %1487 = vmatpush1.bf16.msra.mxu0 %v1327
    %1488 = vmatprep.subr.bf16.mxu0 0
    %1489 = vmatpush1.bf16.msra.mxu0 %v1328
    %1490 = vmatprep.mubr.bf16.mxu0 %v1076
    %1491 = vmatmul.mubr.bf16.gmra.mrb[0].mxu0 %v1075
    %v1492 = vpop.f32.mrb[0].mxu0
    %v1493 = vadd.f32 %v1396, %v1492
    %v1494 = vpop.f32.mrb[0].mxu0
    %v1495 = vpop.f32.mrb[0].mxu0
    %v1496 = vadd.f32 %v1399, %v1495
    %v1497 = vpop.f32.mrb[0].mxu0
    %1498 = vmatprep.mubr.bf16.mxu0 %v1080
    %1499 = vmatmul.mubr.bf16.gmra.mrb[0].mxu0 %v1079
    %v1500 = vpop.f32.mrb[0].mxu0
    %v1501 = vadd.f32 %v1404, %v1500
    %v1502 = vpop.f32.mrb[0].mxu0
    %v1503 = vpop.f32.mrb[0].mxu0
    %v1504 = vadd.f32 %v1407, %v1503
    %v1505 = vpop.f32.mrb[0].mxu0
    %1506 = vmatprep.mubr.bf16.mxu0 %v1084
    %1507 = vmatmul.mubr.bf16.gmra.mrb[0].mxu0 %v1083
    %v1508 = vpop.f32.mrb[0].mxu0
    %v1509 = vadd.f32 %v1412, %v1508
    %v1510 = vpop.f32.mrb[0].mxu0
    %v1511 = vpop.f32.mrb[0].mxu0
    %v1512 = vadd.f32 %v1415, %v1511
    %v1513 = vpop.f32.mrb[0].mxu0
    %1514 = vmatprep.mubr.bf16.mxu0 %v1088
    %1515 = vmatmul.mubr.bf16.gmra.mrb[0].mxu0 %v1087
    %v1516 = vpop.f32.mrb[0].mxu0
    %v1517 = vadd.f32 %v1420, %v1516
    %v1518 = vpop.f32.mrb[0].mxu0
    %v1519 = vpop.f32.mrb[0].mxu0
    %v1520 = vadd.f32 %v1423, %v1519
    %v1521 = vpop.f32.mrb[0].mxu0
    %1522 = vmatprep.mubr.bf16.mxu0 %v1092
    %1523 = vmatmul.mubr.bf16.gmra.mrb[0].mxu0 %v1091
    %v1524 = vpop.f32.mrb[0].mxu0
    %v1525 = vadd.f32 %v1428, %v1524
    %v1526 = vpop.f32.mrb[0].mxu0
    %v1527 = vpop.f32.mrb[0].mxu0
    %v1528 = vadd.f32 %v1431, %v1527
    %v1529 = vpop.f32.mrb[0].mxu0
    %1530 = vmatprep.mubr.bf16.mxu0 %v1096
    %1531 = vmatmul.mubr.bf16.gmra.mrb[0].mxu0 %v1095
    %v1532 = vpop.f32.mrb[0].mxu0
    %v1533 = vadd.f32 %v1436, %v1532
    %v1534 = vpop.f32.mrb[0].mxu0
    %v1535 = vpop.f32.mrb[0].mxu0
    %v1536 = vadd.f32 %v1439, %v1535
    %v1537 = vpop.f32.mrb[0].mxu0
    %1538 = vmatprep.mubr.bf16.mxu0 %v1100
    %1539 = vmatmul.mubr.bf16.gmra.mrb[0].mxu0 %v1099
    %v1540 = vpop.f32.mrb[0].mxu0
    %v1541 = vadd.f32 %v1444, %v1540
    %v1542 = vpop.f32.mrb[0].mxu0
    %v1543 = vpop.f32.mrb[0].mxu0
    %v1544 = vadd.f32 %v1447, %v1543
    %v1545 = vpop.f32.mrb[0].mxu0
    %1546 = vmatprep.mubr.bf16.mxu0 %v1104
    %1547 = vmatmul.mubr.bf16.gmra.mrb[0].mxu0 %v1103
    %v1548 = vpop.f32.mrb[0].mxu0
    %v1549 = vadd.f32 %v1452, %v1548
    %v1550 = vpop.f32.mrb[0].mxu0
    %v1551 = vpop.f32.mrb[0].mxu0
    %v1552 = vadd.f32 %v1455, %v1551
    %v1553 = vpop.f32.mrb[0].mxu0
    %1554 = vdwg.mxu0
    %1555 = vmatprep.subr.bf16.mxu0 0
    %1556 = vmatpush1.bf16.msra.mxu0 %v276
    %1557 = vmatprep.subr.bf16.mxu0 0
    %1558 = vmatpush1.bf16.msra.mxu0 %v277
    %1559 = vmatprep.subr.bf16.mxu0 0
    %1560 = vmatpush1.bf16.msra.mxu0 %v278
    %1561 = vmatprep.subr.bf16.mxu0 0
    %1562 = vmatpush1.bf16.msra.mxu0 %v279
    %1563 = vmatprep.subr.bf16.mxu0 0
    %1564 = vmatpush1.bf16.msra.mxu0 %v280
    %1565 = vmatprep.subr.bf16.mxu0 0
    %1566 = vmatpush1.bf16.msra.mxu0 %v281
    %1567 = vmatprep.subr.bf16.mxu0 0
    %1568 = vmatpush1.bf16.msra.mxu0 %v282
    %1569 = vmatprep.subr.bf16.mxu0 0
    %1570 = vmatpush1.bf16.msra.mxu0 %v283
    %1571 = vmatprep.subr.bf16.mxu0 0
    %1572 = vmatpush1.bf16.msra.mxu0 %v284
    %1573 = vmatprep.subr.bf16.mxu0 0
    %1574 = vmatpush1.bf16.msra.mxu0 %v285
    %1575 = vmatprep.subr.bf16.mxu0 0
    %1576 = vmatpush1.bf16.msra.mxu0 %v286
    %1577 = vmatprep.subr.bf16.mxu0 0
    %1578 = vmatpush1.bf16.msra.mxu0 %v287
    %1579 = vmatprep.subr.bf16.mxu0 0
    %1580 = vmatpush1.bf16.msra.mxu0 %v288
    %1581 = vmatprep.subr.bf16.mxu0 0
    %1582 = vmatpush1.bf16.msra.mxu0 %v289
    %1583 = vmatprep.subr.bf16.mxu0 0
    %1584 = vmatpush1.bf16.msra.mxu0 %v290
    %1585 = vmatprep.subr.bf16.mxu0 0
    %1586 = vmatpush1.bf16.msra.mxu0 %v291
    %1587 = vmatprep.mubr.bf16.mxu0 %v1074
    %1588 = vmatmul.mubr.bf16.gmra.mrb[0].mxu0 %v1073
    %v1589 = vpop.f32.mrb[0].mxu0
    %v1590 = vadd.f32 %v1493, %v1589
    %v1591 = vpop.f32.mrb[0].mxu0
    %v1592 = vpop.f32.mrb[0].mxu0
    %v1593 = vadd.f32 %v1496, %v1592
    %v1594 = vpop.f32.mrb[0].mxu0
    %1595 = vmatprep.mubr.bf16.mxu0 %v1078
    %1596 = vmatmul.mubr.bf16.gmra.mrb[0].mxu0 %v1077
    %v1597 = vpop.f32.mrb[0].mxu0
    %v1598 = vadd.f32 %v1501, %v1597
    %v1599 = vpop.f32.mrb[0].mxu0
    %v1600 = vpop.f32.mrb[0].mxu0
    %v1601 = vadd.f32 %v1504, %v1600
    %v1602 = vpop.f32.mrb[0].mxu0
    %1603 = vmatprep.mubr.bf16.mxu0 %v1082
    %1604 = vmatmul.mubr.bf16.gmra.mrb[0].mxu0 %v1081
    %v1605 = vpop.f32.mrb[0].mxu0
    %v1606 = vadd.f32 %v1509, %v1605
    %v1607 = vpop.f32.mrb[0].mxu0
    %v1608 = vpop.f32.mrb[0].mxu0
    %v1609 = vadd.f32 %v1512, %v1608
    %v1610 = vpop.f32.mrb[0].mxu0
    %1611 = vmatprep.mubr.bf16.mxu0 %v1086
    %1612 = vmatmul.mubr.bf16.gmra.mrb[0].mxu0 %v1085
    %v1613 = vpop.f32.mrb[0].mxu0
    %v1614 = vadd.f32 %v1517, %v1613
    %v1615 = vpop.f32.mrb[0].mxu0
    %v1616 = vpop.f32.mrb[0].mxu0
    %v1617 = vadd.f32 %v1520, %v1616
    %v1618 = vpop.f32.mrb[0].mxu0
    %1619 = vmatprep.mubr.bf16.mxu0 %v1090
    %1620 = vmatmul.mubr.bf16.gmra.mrb[0].mxu0 %v1089
    %v1621 = vpop.f32.mrb[0].mxu0
    %v1622 = vadd.f32 %v1525, %v1621
    %v1623 = vpop.f32.mrb[0].mxu0
    %v1624 = vpop.f32.mrb[0].mxu0
    %v1625 = vadd.f32 %v1528, %v1624
    %v1626 = vpop.f32.mrb[0].mxu0
    %1627 = vmatprep.mubr.bf16.mxu0 %v1094
    %1628 = vmatmul.mubr.bf16.gmra.mrb[0].mxu0 %v1093
    %v1629 = vpop.f32.mrb[0].mxu0
    %v1630 = vadd.f32 %v1533, %v1629
    %v1631 = vpop.f32.mrb[0].mxu0
    %v1632 = vpop.f32.mrb[0].mxu0
    %v1633 = vadd.f32 %v1536, %v1632
    %v1634 = vpop.f32.mrb[0].mxu0
    %1635 = vmatprep.mubr.bf16.mxu0 %v1098
    %1636 = vmatmul.mubr.bf16.gmra.mrb[0].mxu0 %v1097
    %v1637 = vpop.f32.mrb[0].mxu0
    %v1638 = vadd.f32 %v1541, %v1637
    %v1639 = vpop.f32.mrb[0].mxu0
    %v1640 = vpop.f32.mrb[0].mxu0
    %v1641 = vadd.f32 %v1544, %v1640
    %v1642 = vpop.f32.mrb[0].mxu0
    %1643 = vmatprep.mubr.bf16.mxu0 %v1102
    %1644 = vmatmul.mubr.bf16.gmra.mrb[0].mxu0 %v1101
    %v1645 = vpop.f32.mrb[0].mxu0
    %v1646 = vadd.f32 %v1549, %v1645
    %v1647 = vpop.f32.mrb[0].mxu0
    %v1648 = vpop.f32.mrb[0].mxu0
    %v1649 = vadd.f32 %v1552, %v1648
    %v1650 = vpop.f32.mrb[0].mxu0
    %1651 = vdwg.mxu0
    %1652 = vmatprep.subr.bf16.mxu0 0
    %1653 = vmatpush1.bf16.msra.mxu0 %v292
    %1654 = vmatprep.subr.bf16.mxu0 0
    %1655 = vmatpush1.bf16.msra.mxu0 %v293
    %1656 = vmatprep.subr.bf16.mxu0 0
    %1657 = vmatpush1.bf16.msra.mxu0 %v294
    %1658 = vmatprep.subr.bf16.mxu0 0
    %1659 = vmatpush1.bf16.msra.mxu0 %v295
    %1660 = vmatprep.subr.bf16.mxu0 0
    %1661 = vmatpush1.bf16.msra.mxu0 %v296
    %1662 = vmatprep.subr.bf16.mxu0 0
    %1663 = vmatpush1.bf16.msra.mxu0 %v297
    %1664 = vmatprep.subr.bf16.mxu0 0
    %1665 = vmatpush1.bf16.msra.mxu0 %v298
    %1666 = vmatprep.subr.bf16.mxu0 0
    %1667 = vmatpush1.bf16.msra.mxu0 %v299
    %1668 = vmatprep.subr.bf16.mxu0 0
    %1669 = vmatpush1.bf16.msra.mxu0 %v300
    %1670 = vmatprep.subr.bf16.mxu0 0
    %1671 = vmatpush1.bf16.msra.mxu0 %v301
    %1672 = vmatprep.subr.bf16.mxu0 0
    %1673 = vmatpush1.bf16.msra.mxu0 %v302
    %1674 = vmatprep.subr.bf16.mxu0 0
    %1675 = vmatpush1.bf16.msra.mxu0 %v303
    %1676 = vmatprep.subr.bf16.mxu0 0
    %1677 = vmatpush1.bf16.msra.mxu0 %v304
    %1678 = vmatprep.subr.bf16.mxu0 0
    %1679 = vmatpush1.bf16.msra.mxu0 %v305
    %1680 = vmatprep.subr.bf16.mxu0 0
    %1681 = vmatpush1.bf16.msra.mxu0 %v306
    %1682 = vmatprep.subr.bf16.mxu0 0
    %1683 = vmatpush1.bf16.msra.mxu0 %v307
    %1684 = vmatprep.mubr.bf16.mxu0 %v1076
    %1685 = vmatmul.mubr.bf16.gmra.mrb[0].mxu0 %v1075
    %v1686 = vpop.f32.mrb[0].mxu0
    %v1687 = vadd.f32 %v1590, %v1686
    %v1688 = vpop.f32.mrb[0].mxu0
    %v1689 = vpop.f32.mrb[0].mxu0
    %v1690 = vadd.f32 %v1593, %v1689
    %v1691 = vpop.f32.mrb[0].mxu0
    %1692 = vmatprep.mubr.bf16.mxu0 %v1080
    %1693 = vmatmul.mubr.bf16.gmra.mrb[0].mxu0 %v1079
    %v1694 = vpop.f32.mrb[0].mxu0
    %v1695 = vadd.f32 %v1598, %v1694
    %v1696 = vpop.f32.mrb[0].mxu0
    %v1697 = vpop.f32.mrb[0].mxu0
    %v1698 = vadd.f32 %v1601, %v1697
    %v1699 = vpop.f32.mrb[0].mxu0
    %1700 = vmatprep.mubr.bf16.mxu0 %v1084
    %1701 = vmatmul.mubr.bf16.gmra.mrb[0].mxu0 %v1083
    %v1702 = vpop.f32.mrb[0].mxu0
    %v1703 = vadd.f32 %v1606, %v1702
    %v1704 = vpop.f32.mrb[0].mxu0
    %v1705 = vpop.f32.mrb[0].mxu0
    %v1706 = vadd.f32 %v1609, %v1705
    %v1707 = vpop.f32.mrb[0].mxu0
    %1708 = vmatprep.mubr.bf16.mxu0 %v1088
    %1709 = vmatmul.mubr.bf16.gmra.mrb[0].mxu0 %v1087
    %v1710 = vpop.f32.mrb[0].mxu0
    %v1711 = vadd.f32 %v1614, %v1710
    %v1712 = vpop.f32.mrb[0].mxu0
    %v1713 = vpop.f32.mrb[0].mxu0
    %v1714 = vadd.f32 %v1617, %v1713
    %v1715 = vpop.f32.mrb[0].mxu0
    %1716 = vmatprep.mubr.bf16.mxu0 %v1092
    %1717 = vmatmul.mubr.bf16.gmra.mrb[0].mxu0 %v1091
    %v1718 = vpop.f32.mrb[0].mxu0
    %v1719 = vadd.f32 %v1622, %v1718
    %v1720 = vpop.f32.mrb[0].mxu0
    %v1721 = vpop.f32.mrb[0].mxu0
    %v1722 = vadd.f32 %v1625, %v1721
    %v1723 = vpop.f32.mrb[0].mxu0
    %1724 = vmatprep.mubr.bf16.mxu0 %v1096
    %1725 = vmatmul.mubr.bf16.gmra.mrb[0].mxu0 %v1095
    %v1726 = vpop.f32.mrb[0].mxu0
    %v1727 = vadd.f32 %v1630, %v1726
    %v1728 = vpop.f32.mrb[0].mxu0
    %v1729 = vpop.f32.mrb[0].mxu0
    %v1730 = vadd.f32 %v1633, %v1729
    %v1731 = vpop.f32.mrb[0].mxu0
    %1732 = vmatprep.mubr.bf16.mxu0 %v1100
    %1733 = vmatmul.mubr.bf16.gmra.mrb[0].mxu0 %v1099
    %v1734 = vpop.f32.mrb[0].mxu0
    %v1735 = vadd.f32 %v1638, %v1734
    %v1736 = vpop.f32.mrb[0].mxu0
    %v1737 = vpop.f32.mrb[0].mxu0
    %v1738 = vadd.f32 %v1641, %v1737
    %v1739 = vpop.f32.mrb[0].mxu0
    %1740 = vmatprep.mubr.bf16.mxu0 %v1104
    %1741 = vmatmul.mubr.bf16.gmra.mrb[0].mxu0 %v1103
    %v1742 = vpop.f32.mrb[0].mxu0
    %v1743 = vadd.f32 %v1646, %v1742
    %v1744 = vpop.f32.mrb[0].mxu0
    %v1745 = vpop.f32.mrb[0].mxu0
    %v1746 = vadd.f32 %v1649, %v1745
    %v1747 = vpop.f32.mrb[0].mxu0
    %1748 = vdwg.mxu0
    %1749 = vst [vmem:[#allocation8] sm:$0xff] %v1687
    %1750 = vst [vmem:[#allocation8 + $0x8] sm:$0xff] %v1690
    %1751 = vst [vmem:[#allocation8 + $0x10] sm:$0xff] %v1695
    %1752 = vst [vmem:[#allocation8 + $0x18] sm:$0xff] %v1698
    %1753 = vst [vmem:[#allocation8 + $0x20] sm:$0xff] %v1703
    %1754 = vst [vmem:[#allocation8 + $0x28] sm:$0xff] %v1706
    %1755 = vst [vmem:[#allocation8 + $0x30] sm:$0xff] %v1711
    %1756 = vst [vmem:[#allocation8 + $0x38] sm:$0xff] %v1714
    %1757 = vst [vmem:[#allocation8 + $0x40] sm:$0xff] %v1719
    %1758 = vst [vmem:[#allocation8 + $0x48] sm:$0xff] %v1722
    %1759 = vst [vmem:[#allocation8 + $0x50] sm:$0xff] %v1727
    %1760 = vst [vmem:[#allocation8 + $0x58] sm:$0xff] %v1730
    %1761 = vst [vmem:[#allocation8 + $0x60] sm:$0xff] %v1735
    %1762 = vst [vmem:[#allocation8 + $0x68] sm:$0xff] %v1738
    %1763 = vst [vmem:[#allocation8 + $0x70] sm:$0xff] %v1743
    %1764 = vst [vmem:[#allocation8 + $0x78] sm:$0xff] %v1746
    // Predicated region
    $region30: #{tpu_custom_call.1} parent=1 // pred_check
      _
    $region31: #{tpu_custom_call.1} parent=1 // pred_check_branch
      %1766 = sbr.rel (0) target = $region33
    $region32: #{tpu_custom_call.1} parent=1 // pred_region
      %s1768 = ssub.s32 2048, 2048
      %1769 = vsyncadd [#allocation4], %s1768
      %s1770 = sshll.u32 [#allocation8], 4
      %s1771 = int_to_ptr.vmem [resolvable:$true] %s1770
      %1776 = dma.vmem_to_hbm [thread:$0]  %s1771, 2048, %s4, [#allocation4], 128, 128, 8
    $region33: #{tpu_custom_call.1} parent=1 // pred_fallthru
      _
    // Predicated region
    $region34: #{tpu_custom_call.1} parent=1 // pred_check
      _
    $region35: #{tpu_custom_call.1} parent=1 // pred_check_branch
      %1778 = sbr.rel (0) target = $region37
    $region36: #{tpu_custom_call.1} parent=1 // pred_region
      %1779 = dma.done [#allocation4], 2048
    $region37: #{tpu_custom_call.1} parent=1 // pred_fallthru
      _
    %1780 = vsyncpa [#allocation3], 1
    %1781 = vsyncpa [#allocation6], 1
    %1782 = vsyncpa [#allocation4], 1

</llo_original>
